<compile_context>
chip_gen: v6e
topology: v6e:2x2x1
jax: 0.10.0
libtpu: 0.0.40
codegen_flags: <defaults>
</compile_context>

<pallas_src>
import functools

import jax
import jax.numpy as jnp
import numpy as np
from jax import lax
from jax.experimental import pallas as pl
from jax.experimental.pallas import tpu as pltpu

KH, KW = 7, 7          # conv kernel size
PH, PW = 3, 3          # conv padding


def _lsa_kernel(w_ref, x_ref, o_ref, pmap_ref, pshift_ref, srow_ref, sflat_ref,
                *, H, W, Ct):
    # w_ref:      (7, 7) f32 in SMEM (scalar reads)
    # x_ref:      (Bt, C, H*W) block in VMEM (lane-dense)
    # o_ref:      (Bt, C, H*W) block in VMEM (lane-dense)
    # pmap_ref:   (H+6, W+6) f32 scratch — zero-padded 2D attention map
    # pshift_ref: (7, H+6, W) f32 scratch — per-column-tap lane-shifted copies
    # srow_ref:   (H, W)  f32 scratch — sigmoid(conv) in 2D layout
    # sflat_ref:  (1, HW) f32 scratch — sigmoid(conv) back in flat layout
    Bt, C, HW = x_ref.shape
    n_chunks = C // Ct
    unroll_c = n_chunks if n_chunks <= 8 else 4   # partial unroll for long loops

    # 49 conv weights as SMEM scalars, hoisted out of the batch loop.
    wvals = [[w_ref[i, j] for j in range(KW)] for i in range(KH)]
    half_inv_c = jnp.float32(0.5 / C)

    def batch_body(b, carry):
        # ---- fused channel mean + max at full vreg density: (Ct, HW) f32
        #      accumulators, one cross-sublane sum/max after the loop. ----------
        def red_body(k, red_carry):
            s_acc, m_acc = red_carry
            c0 = pl.multiple_of(k * Ct, Ct)
            chunk = x_ref[b, pl.ds(c0, Ct), :].astype(jnp.float32)   # (Ct, HW)
            return s_acc + chunk, jnp.maximum(m_acc, chunk)

        s0 = jnp.zeros((Ct, HW), jnp.float32)
        m0 = jnp.full((Ct, HW), -jnp.inf, jnp.float32)
        s_acc, m_acc = lax.fori_loop(0, n_chunks, red_body, (s0, m0),
                                     unroll=unroll_c)
        attn = (half_inv_c * jnp.sum(s_acc, axis=0, keepdims=True)
                + 0.5 * jnp.max(m_acc, axis=0, keepdims=True))       # (1, HW)

        # ---- scatter the flat map into the zero-padded 2D scratch
        #      (rows on sublanes, cols on lanes). --------------------------------
        pmap_ref[...] = jnp.zeros((H + 2 * PH, W + 2 * PW), jnp.float32)
        for r in range(H):
            pmap_ref[pl.ds(PH + r, 1), pl.ds(PW, W)] = attn[:, r * W:(r + 1) * W]

        # ---- one lane shift per column tap, shared across the 7 row taps. ------
        for j in range(KW):
            pshift_ref[j, :, :] = pmap_ref[:, pl.ds(j, W)]            # (H+6, W)

        # ---- 7x7 conv (padding=3): 49 cheap sublane-offset reads + mul-adds
        #      at full (H, W) density; 7 independent accumulator chains. ---------
        parts = []
        for i in range(KH):
            acc = None
            for j in range(KW):
                term = wvals[i][j] * pshift_ref[j, pl.ds(i, H), :]    # (H, W)
                acc = term if acc is None else acc + term
            parts.append(acc)
        conv = (((parts[0] + parts[1]) + (parts[2] + parts[3]))
                + ((parts[4] + parts[5]) + parts[6]))                 # (H, W)

        # ---- sigmoid, then gather rows back to the lane-dense flat layout. -----
        srow_ref[...] = jax.nn.sigmoid(conv)
        for r in range(H):
            sflat_ref[pl.ds(0, 1), pl.ds(r * W, W)] = srow_ref[pl.ds(r, 1), :]

        # Hoisted: cast once, sublane-broadcast once (not per multiply chunk).
        scale_blk = jnp.broadcast_to(sflat_ref[...].astype(o_ref.dtype), (Ct, HW))

        # ---- out = x * sigmoid(conv(a)), chunked over C -------------------------
        def mul_body(k, mul_carry):
            c0 = pl.multiple_of(k * Ct, Ct)
            sl = pl.ds(c0, Ct)
            o_ref[b, sl, :] = x_ref[b, sl, :] * scale_blk
            return mul_carry

        lax.fori_loop(0, n_chunks, mul_body, 0, unroll=unroll_c)
        return carry

    lax.fori_loop(0, Bt, batch_body, 0)


def _row_pack(dtype) -> int:
    """Rows per vreg sublane group for this dtype (8 f32, 16 bf16, 32 int8)."""
    return 8 * max(1, 4 // jnp.dtype(dtype).itemsize)


def _pick_channel_chunk(C: int, dtype) -> int:
    """Smallest full-density, pack-aligned chunk dividing C; else largest divisor."""
    pack = _row_pack(dtype)
    if C % pack == 0:
        return pack
    for ct in range(min(C, pack), 0, -1):
        if C % ct == 0:
            return ct
    return 1


def _pick_batch_block(B: int, per_batch_bytes: int,
                      target_bytes: int = 256 << 10,
                      cap_bytes: int = 4 << 20) -> int:
    """Largest Bt dividing B s.t. the grid keeps >=4 steps when B allows it,
    the block stays <= cap, and growth stops once the block reaches target."""
    max_bt = max(1, B // 4) if B >= 4 else 1
    bt = 1
    for d in range(1, B + 1):
        if B % d:
            continue
        if d > max_bt or d * per_batch_bytes > cap_bytes:
            break
        bt = d
        if d * per_batch_bytes >= target_bytes:
            break
    return bt


@jax.jit
def light_spatial_attention(x, weight):
    """x: (B, C, H, W); weight: (7, 7) Conv2d(1,1,7,padding=3,bias=False) filter."""
    B, C, H, W = x.shape
    HW = H * W

    # Lane-dense layout: last dim H*W maps densely onto the 128-lane axis.
    x2 = x.reshape(B, C, HW)
    weight = weight.astype(jnp.float32)

    Ct = _pick_channel_chunk(C, x.dtype)
    per_batch_bytes = C * HW * x.dtype.itemsize
    Bt = _pick_batch_block(B, per_batch_bytes)

    # VMEM budget: double-buffered in+out blocks + conv scratch + margin; capped
    # at 48 MiB to stay well below v7x's 64 MiB physical VMEM (fine on v5e/v6e).
    scratch_bytes = 4 * ((H + 2 * PH) * (W + 2 * PW)
                         + KW * (H + 2 * PH) * W + H * W + HW)
    need = 4 * Bt * per_batch_bytes + scratch_bytes + (4 << 20)
    if need <= (48 << 20):
        vmem_limit = int(max(32 << 20, need))
    else:
        # TODO(synk): add an H-tile grid axis (3-row halo recompute) instead of
        # growing the limit for huge C*H*W blocks; also needed to keep both v7x
        # TensorCores busy when B == 1.
        vmem_limit = int(need)

    kernel = functools.partial(_lsa_kernel, H=H, W=W, Ct=Ct)
    out = pl.pallas_call(
        kernel,
        out_shape=jax.ShapeDtypeStruct((B, C, HW), x.dtype),
        grid=(B // Bt,),
        in_specs=[
            pl.BlockSpec(memory_space=pltpu.SMEM),            # (7, 7) conv weights
            pl.BlockSpec((Bt, C, HW), lambda i: (i, 0, 0)),   # x block (lane-dense)
        ],
        out_specs=pl.BlockSpec((Bt, C, HW), lambda i: (i, 0, 0)),
        scratch_shapes=[
            pltpu.VMEM((H + 2 * PH, W + 2 * PW), jnp.float32),  # padded 2D attn map
            pltpu.VMEM((KW, H + 2 * PH, W), jnp.float32),       # 7 lane-shifted copies
            pltpu.VMEM((H, W), jnp.float32),                    # sigmoid map (2D)
            pltpu.VMEM((1, HW), jnp.float32),                   # sigmoid map (flat)
        ],
        compiler_params=pltpu.CompilerParams(
            dimension_semantics=("parallel",),
            vmem_limit_bytes=vmem_limit,
        ),
    )(weight, x2)
    return out.reshape(B, C, H, W)


def _reference(x, weight):
    """Pure-JAX reference mirroring the PyTorch forward."""
    x_avg = jnp.mean(x, axis=1, keepdims=True)
    x_max = jnp.max(x, axis=1, keepdims=True)
    attn = 0.5 * x_avg + 0.5 * x_max                       # (B, 1, H, W)
    w = weight.reshape(1, 1, KH, KW)                       # OIHW
    conv = lax.conv_general_dilated(
        attn, w, window_strides=(1, 1), padding=((PH, PH), (PW, PW)),
        dimension_numbers=("NCHW", "OIHW", "NCHW"))
    return x * jax.nn.sigmoid(conv)


if __name__ == "__main__":
    key = jax.random.PRNGKey(0)
    kx, kw = jax.random.split(key)

    B, C, H, W = 2, 4, 16, 16
    x = jax.random.normal(kx, (B, C, H, W), dtype=jnp.float32)

    # Deterministic Conv2d(1,1,7,bias=False) weight init (PyTorch default:
    # uniform(-1/sqrt(fan_in), 1/sqrt(fan_in)), fan_in = 1*7*7 = 49).
    bound = 1.0 / np.sqrt(KH * KW)
    weight = jax.random.uniform(kw, (KH, KW), dtype=jnp.float32,
                                minval=-bound, maxval=bound)

    out = jax.block_until_ready(light_spatial_attention(x, weight))

    ref = _reference(x, weight)
    np.testing.assert_allclose(np.asarray(out), np.asarray(ref),
                               rtol=2e-5, atol=2e-5)
    print("KERNEL_OK")
</pallas_src>

<mosaic_0001>
module attributes {stable_mosaic.version = 11 : i64} {
  func.func @_lsa_kernel(%arg0: i32, %arg1: memref<7x7xf32, #tpu.memory_space<smem>>, %arg2: memref<1x4x256xf32, #tpu.memory_space<vmem>>, %arg3: memref<1x4x256xf32, #tpu.memory_space<vmem>>, %arg4: memref<22x22xf32, #tpu.memory_space<vmem>>, %arg5: memref<7x22x16xf32, #tpu.memory_space<vmem>>, %arg6: memref<16x16xf32, #tpu.memory_space<vmem>>, %arg7: memref<1x256xf32, #tpu.memory_space<vmem>>) attributes {dimension_semantics = [#tpu.dimension_semantics<parallel>], iteration_bounds = array<i64: 2>, scalar_prefetch = 0 : i64, scratch_operands = 4 : i64, tpu.core_type = #tpu.core_type<tc>, window_params = [{transform_indices = @transform_0, window_bounds = array<i64: 7, 7>}, {transform_indices = @transform_1, window_bounds = array<i64: 1, 4, 256>}, {transform_indices = @transform_2, window_bounds = array<i64: 1, 4, 256>}]} {
    %c0 = arith.constant 0 : index
    %c0_0 = arith.constant 0 : index
    %0 = memref.load %arg1[%c0, %c0_0] : memref<7x7xf32, #tpu.memory_space<smem>>
    %c0_1 = arith.constant 0 : index
    %c1 = arith.constant 1 : index
    %1 = memref.load %arg1[%c0_1, %c1] : memref<7x7xf32, #tpu.memory_space<smem>>
    %c0_2 = arith.constant 0 : index
    %c2 = arith.constant 2 : index
    %2 = memref.load %arg1[%c0_2, %c2] : memref<7x7xf32, #tpu.memory_space<smem>>
    %c0_3 = arith.constant 0 : index
    %c3 = arith.constant 3 : index
    %3 = memref.load %arg1[%c0_3, %c3] : memref<7x7xf32, #tpu.memory_space<smem>>
    %c0_4 = arith.constant 0 : index
    %c4 = arith.constant 4 : index
    %4 = memref.load %arg1[%c0_4, %c4] : memref<7x7xf32, #tpu.memory_space<smem>>
    %c0_5 = arith.constant 0 : index
    %c5 = arith.constant 5 : index
    %5 = memref.load %arg1[%c0_5, %c5] : memref<7x7xf32, #tpu.memory_space<smem>>
    %c0_6 = arith.constant 0 : index
    %c6 = arith.constant 6 : index
    %6 = memref.load %arg1[%c0_6, %c6] : memref<7x7xf32, #tpu.memory_space<smem>>
    %c1_7 = arith.constant 1 : index
    %c0_8 = arith.constant 0 : index
    %7 = memref.load %arg1[%c1_7, %c0_8] : memref<7x7xf32, #tpu.memory_space<smem>>
    %c1_9 = arith.constant 1 : index
    %c1_10 = arith.constant 1 : index
    %8 = memref.load %arg1[%c1_9, %c1_10] : memref<7x7xf32, #tpu.memory_space<smem>>
    %c1_11 = arith.constant 1 : index
    %c2_12 = arith.constant 2 : index
    %9 = memref.load %arg1[%c1_11, %c2_12] : memref<7x7xf32, #tpu.memory_space<smem>>
    %c1_13 = arith.constant 1 : index
    %c3_14 = arith.constant 3 : index
    %10 = memref.load %arg1[%c1_13, %c3_14] : memref<7x7xf32, #tpu.memory_space<smem>>
    %c1_15 = arith.constant 1 : index
    %c4_16 = arith.constant 4 : index
    %11 = memref.load %arg1[%c1_15, %c4_16] : memref<7x7xf32, #tpu.memory_space<smem>>
    %c1_17 = arith.constant 1 : index
    %c5_18 = arith.constant 5 : index
    %12 = memref.load %arg1[%c1_17, %c5_18] : memref<7x7xf32, #tpu.memory_space<smem>>
    %c1_19 = arith.constant 1 : index
    %c6_20 = arith.constant 6 : index
    %13 = memref.load %arg1[%c1_19, %c6_20] : memref<7x7xf32, #tpu.memory_space<smem>>
    %c2_21 = arith.constant 2 : index
    %c0_22 = arith.constant 0 : index
    %14 = memref.load %arg1[%c2_21, %c0_22] : memref<7x7xf32, #tpu.memory_space<smem>>
    %c2_23 = arith.constant 2 : index
    %c1_24 = arith.constant 1 : index
    %15 = memref.load %arg1[%c2_23, %c1_24] : memref<7x7xf32, #tpu.memory_space<smem>>
    %c2_25 = arith.constant 2 : index
    %c2_26 = arith.constant 2 : index
    %16 = memref.load %arg1[%c2_25, %c2_26] : memref<7x7xf32, #tpu.memory_space<smem>>
    %c2_27 = arith.constant 2 : index
    %c3_28 = arith.constant 3 : index
    %17 = memref.load %arg1[%c2_27, %c3_28] : memref<7x7xf32, #tpu.memory_space<smem>>
    %c2_29 = arith.constant 2 : index
    %c4_30 = arith.constant 4 : index
    %18 = memref.load %arg1[%c2_29, %c4_30] : memref<7x7xf32, #tpu.memory_space<smem>>
    %c2_31 = arith.constant 2 : index
    %c5_32 = arith.constant 5 : index
    %19 = memref.load %arg1[%c2_31, %c5_32] : memref<7x7xf32, #tpu.memory_space<smem>>
    %c2_33 = arith.constant 2 : index
    %c6_34 = arith.constant 6 : index
    %20 = memref.load %arg1[%c2_33, %c6_34] : memref<7x7xf32, #tpu.memory_space<smem>>
    %c3_35 = arith.constant 3 : index
    %c0_36 = arith.constant 0 : index
    %21 = memref.load %arg1[%c3_35, %c0_36] : memref<7x7xf32, #tpu.memory_space<smem>>
    %c3_37 = arith.constant 3 : index
    %c1_38 = arith.constant 1 : index
    %22 = memref.load %arg1[%c3_37, %c1_38] : memref<7x7xf32, #tpu.memory_space<smem>>
    %c3_39 = arith.constant 3 : index
    %c2_40 = arith.constant 2 : index
    %23 = memref.load %arg1[%c3_39, %c2_40] : memref<7x7xf32, #tpu.memory_space<smem>>
    %c3_41 = arith.constant 3 : index
    %c3_42 = arith.constant 3 : index
    %24 = memref.load %arg1[%c3_41, %c3_42] : memref<7x7xf32, #tpu.memory_space<smem>>
    %c3_43 = arith.constant 3 : index
    %c4_44 = arith.constant 4 : index
    %25 = memref.load %arg1[%c3_43, %c4_44] : memref<7x7xf32, #tpu.memory_space<smem>>
    %c3_45 = arith.constant 3 : index
    %c5_46 = arith.constant 5 : index
    %26 = memref.load %arg1[%c3_45, %c5_46] : memref<7x7xf32, #tpu.memory_space<smem>>
    %c3_47 = arith.constant 3 : index
    %c6_48 = arith.constant 6 : index
    %27 = memref.load %arg1[%c3_47, %c6_48] : memref<7x7xf32, #tpu.memory_space<smem>>
    %c4_49 = arith.constant 4 : index
    %c0_50 = arith.constant 0 : index
    %28 = memref.load %arg1[%c4_49, %c0_50] : memref<7x7xf32, #tpu.memory_space<smem>>
    %c4_51 = arith.constant 4 : index
    %c1_52 = arith.constant 1 : index
    %29 = memref.load %arg1[%c4_51, %c1_52] : memref<7x7xf32, #tpu.memory_space<smem>>
    %c4_53 = arith.constant 4 : index
    %c2_54 = arith.constant 2 : index
    %30 = memref.load %arg1[%c4_53, %c2_54] : memref<7x7xf32, #tpu.memory_space<smem>>
    %c4_55 = arith.constant 4 : index
    %c3_56 = arith.constant 3 : index
    %31 = memref.load %arg1[%c4_55, %c3_56] : memref<7x7xf32, #tpu.memory_space<smem>>
    %c4_57 = arith.constant 4 : index
    %c4_58 = arith.constant 4 : index
    %32 = memref.load %arg1[%c4_57, %c4_58] : memref<7x7xf32, #tpu.memory_space<smem>>
    %c4_59 = arith.constant 4 : index
    %c5_60 = arith.constant 5 : index
    %33 = memref.load %arg1[%c4_59, %c5_60] : memref<7x7xf32, #tpu.memory_space<smem>>
    %c4_61 = arith.constant 4 : index
    %c6_62 = arith.constant 6 : index
    %34 = memref.load %arg1[%c4_61, %c6_62] : memref<7x7xf32, #tpu.memory_space<smem>>
    %c5_63 = arith.constant 5 : index
    %c0_64 = arith.constant 0 : index
    %35 = memref.load %arg1[%c5_63, %c0_64] : memref<7x7xf32, #tpu.memory_space<smem>>
    %c5_65 = arith.constant 5 : index
    %c1_66 = arith.constant 1 : index
    %36 = memref.load %arg1[%c5_65, %c1_66] : memref<7x7xf32, #tpu.memory_space<smem>>
    %c5_67 = arith.constant 5 : index
    %c2_68 = arith.constant 2 : index
    %37 = memref.load %arg1[%c5_67, %c2_68] : memref<7x7xf32, #tpu.memory_space<smem>>
    %c5_69 = arith.constant 5 : index
    %c3_70 = arith.constant 3 : index
    %38 = memref.load %arg1[%c5_69, %c3_70] : memref<7x7xf32, #tpu.memory_space<smem>>
    %c5_71 = arith.constant 5 : index
    %c4_72 = arith.constant 4 : index
    %39 = memref.load %arg1[%c5_71, %c4_72] : memref<7x7xf32, #tpu.memory_space<smem>>
    %c5_73 = arith.constant 5 : index
    %c5_74 = arith.constant 5 : index
    %40 = memref.load %arg1[%c5_73, %c5_74] : memref<7x7xf32, #tpu.memory_space<smem>>
    %c5_75 = arith.constant 5 : index
    %c6_76 = arith.constant 6 : index
    %41 = memref.load %arg1[%c5_75, %c6_76] : memref<7x7xf32, #tpu.memory_space<smem>>
    %c6_77 = arith.constant 6 : index
    %c0_78 = arith.constant 0 : index
    %42 = memref.load %arg1[%c6_77, %c0_78] : memref<7x7xf32, #tpu.memory_space<smem>>
    %c6_79 = arith.constant 6 : index
    %c1_80 = arith.constant 1 : index
    %43 = memref.load %arg1[%c6_79, %c1_80] : memref<7x7xf32, #tpu.memory_space<smem>>
    %c6_81 = arith.constant 6 : index
    %c2_82 = arith.constant 2 : index
    %44 = memref.load %arg1[%c6_81, %c2_82] : memref<7x7xf32, #tpu.memory_space<smem>>
    %c6_83 = arith.constant 6 : index
    %c3_84 = arith.constant 3 : index
    %45 = memref.load %arg1[%c6_83, %c3_84] : memref<7x7xf32, #tpu.memory_space<smem>>
    %c6_85 = arith.constant 6 : index
    %c4_86 = arith.constant 4 : index
    %46 = memref.load %arg1[%c6_85, %c4_86] : memref<7x7xf32, #tpu.memory_space<smem>>
    %c6_87 = arith.constant 6 : index
    %c5_88 = arith.constant 5 : index
    %47 = memref.load %arg1[%c6_87, %c5_88] : memref<7x7xf32, #tpu.memory_space<smem>>
    %c6_89 = arith.constant 6 : index
    %c6_90 = arith.constant 6 : index
    %48 = memref.load %arg1[%c6_89, %c6_90] : memref<7x7xf32, #tpu.memory_space<smem>>
    %cst = arith.constant 1.250000e-01 : f32
    %c0_i32 = arith.constant 0 : i32
    %cst_91 = arith.constant 0.000000e+00 : f32
    %49 = vector.broadcast %cst_91 : f32 to vector<4x256xf32>
    %cst_92 = arith.constant 0xFF800000 : f32
    %50 = vector.broadcast %cst_92 : f32 to vector<4x256xf32>
    %c0_i32_93 = arith.constant 0 : i32
    %c4_i32 = arith.constant 4 : i32
    %51 = arith.muli %c0_i32_93, %c4_i32 : i32
    %52 = tpu.assume_multiple %51, 4 : i32
    %53 = arith.index_cast %c0_i32 : i32 to index
    %54 = arith.index_cast %52 : i32 to index
    %c0_94 = arith.constant 0 : index
    %55 = vector.load %arg2[%53, %54, %c0_94] : memref<1x4x256xf32, #tpu.memory_space<vmem>>, vector<1x4x256xf32>
    %56 = vector.shape_cast %55 : vector<1x4x256xf32> to vector<4x256xf32>
    %57 = arith.addf %49, %56 : vector<4x256xf32>
    %58 = arith.maximumf %50, %56 : vector<4x256xf32>
    %c1_i32 = arith.constant 1 : i32
    %cst_95 = arith.constant dense<0.000000e+00> : vector<256xf32>
    %59 = vector.multi_reduction <add>, %57, %cst_95 [0] : vector<4x256xf32> to vector<256xf32>
    %60 = vector.shape_cast %59 : vector<256xf32> to vector<1x256xf32>
    %61 = vector.broadcast %cst : f32 to vector<1x256xf32>
    %62 = arith.mulf %61, %60 : vector<1x256xf32>
    %cst_96 = arith.constant dense<0xFF800000> : vector<256xf32>
    %63 = vector.multi_reduction <maximumf>, %58, %cst_96 [0] : vector<4x256xf32> to vector<256xf32>
    %64 = vector.shape_cast %63 : vector<256xf32> to vector<1x256xf32>
    %cst_97 = arith.constant 5.000000e-01 : f32
    %65 = vector.broadcast %cst_97 : f32 to vector<1x256xf32>
    %66 = arith.mulf %65, %64 : vector<1x256xf32>
    %67 = arith.addf %62, %66 : vector<1x256xf32>
    %cst_98 = arith.constant 0.000000e+00 : f32
    %68 = vector.broadcast %cst_98 : f32 to vector<22x22xf32>
    %c0_99 = arith.constant 0 : index
    %c0_100 = arith.constant 0 : index
    %69 = vector.load %arg4[%c0_99, %c0_100] : memref<22x22xf32, #tpu.memory_space<vmem>>, vector<22x22xf32>
    tpu.vector_store %arg4[%c0_99, %c0_100], %68 {strides = array<i32>} : memref<22x22xf32, #tpu.memory_space<vmem>>, vector<22x22xf32>,
    %70 = vector.extract_strided_slice %67 {offsets = [0, 0], sizes = [1, 16], strides = [1, 1]} : vector<1x256xf32> to vector<1x16xf32>
    %c3_101 = arith.constant 3 : index
    %c3_102 = arith.constant 3 : index
    %71 = vector.load %arg4[%c3_101, %c3_102] : memref<22x22xf32, #tpu.memory_space<vmem>>, vector<1x16xf32>
    tpu.vector_store %arg4[%c3_101, %c3_102], %70 {strides = array<i32>} : memref<22x22xf32, #tpu.memory_space<vmem>>, vector<1x16xf32>,
    %72 = vector.extract_strided_slice %67 {offsets = [0, 16], sizes = [1, 16], strides = [1, 1]} : vector<1x256xf32> to vector<1x16xf32>
    %c4_103 = arith.constant 4 : index
    %c3_104 = arith.constant 3 : index
    %73 = vector.load %arg4[%c4_103, %c3_104] : memref<22x22xf32, #tpu.memory_space<vmem>>, vector<1x16xf32>
    tpu.vector_store %arg4[%c4_103, %c3_104], %72 {strides = array<i32>} : memref<22x22xf32, #tpu.memory_space<vmem>>, vector<1x16xf32>,
    %74 = vector.extract_strided_slice %67 {offsets = [0, 32], sizes = [1, 16], strides = [1, 1]} : vector<1x256xf32> to vector<1x16xf32>
    %c5_105 = arith.constant 5 : index
    %c3_106 = arith.constant 3 : index
    %75 = vector.load %arg4[%c5_105, %c3_106] : memref<22x22xf32, #tpu.memory_space<vmem>>, vector<1x16xf32>
    tpu.vector_store %arg4[%c5_105, %c3_106], %74 {strides = array<i32>} : memref<22x22xf32, #tpu.memory_space<vmem>>, vector<1x16xf32>,
    %76 = vector.extract_strided_slice %67 {offsets = [0, 48], sizes = [1, 16], strides = [1, 1]} : vector<1x256xf32> to vector<1x16xf32>
    %c6_107 = arith.constant 6 : index
    %c3_108 = arith.constant 3 : index
    %77 = vector.load %arg4[%c6_107, %c3_108] : memref<22x22xf32, #tpu.memory_space<vmem>>, vector<1x16xf32>
    tpu.vector_store %arg4[%c6_107, %c3_108], %76 {strides = array<i32>} : memref<22x22xf32, #tpu.memory_space<vmem>>, vector<1x16xf32>,
    %78 = vector.extract_strided_slice %67 {offsets = [0, 64], sizes = [1, 16], strides = [1, 1]} : vector<1x256xf32> to vector<1x16xf32>
    %c7 = arith.constant 7 : index
    %c3_109 = arith.constant 3 : index
    %79 = vector.load %arg4[%c7, %c3_109] : memref<22x22xf32, #tpu.memory_space<vmem>>, vector<1x16xf32>
    tpu.vector_store %arg4[%c7, %c3_109], %78 {strides = array<i32>} : memref<22x22xf32, #tpu.memory_space<vmem>>, vector<1x16xf32>,
    %80 = vector.extract_strided_slice %67 {offsets = [0, 80], sizes = [1, 16], strides = [1, 1]} : vector<1x256xf32> to vector<1x16xf32>
    %c8 = arith.constant 8 : index
    %c3_110 = arith.constant 3 : index
    %81 = vector.load %arg4[%c8, %c3_110] : memref<22x22xf32, #tpu.memory_space<vmem>>, vector<1x16xf32>
    tpu.vector_store %arg4[%c8, %c3_110], %80 {strides = array<i32>} : memref<22x22xf32, #tpu.memory_space<vmem>>, vector<1x16xf32>,
    %82 = vector.extract_strided_slice %67 {offsets = [0, 96], sizes = [1, 16], strides = [1, 1]} : vector<1x256xf32> to vector<1x16xf32>
    %c9 = arith.constant 9 : index
    %c3_111 = arith.constant 3 : index
    %83 = vector.load %arg4[%c9, %c3_111] : memref<22x22xf32, #tpu.memory_space<vmem>>, vector<1x16xf32>
    tpu.vector_store %arg4[%c9, %c3_111], %82 {strides = array<i32>} : memref<22x22xf32, #tpu.memory_space<vmem>>, vector<1x16xf32>,
    %84 = vector.extract_strided_slice %67 {offsets = [0, 112], sizes = [1, 16], strides = [1, 1]} : vector<1x256xf32> to vector<1x16xf32>
    %c10 = arith.constant 10 : index
    %c3_112 = arith.constant 3 : index
    %85 = vector.load %arg4[%c10, %c3_112] : memref<22x22xf32, #tpu.memory_space<vmem>>, vector<1x16xf32>
    tpu.vector_store %arg4[%c10, %c3_112], %84 {strides = array<i32>} : memref<22x22xf32, #tpu.memory_space<vmem>>, vector<1x16xf32>,
    %86 = vector.extract_strided_slice %67 {offsets = [0, 128], sizes = [1, 16], strides = [1, 1]} : vector<1x256xf32> to vector<1x16xf32>
    %c11 = arith.constant 11 : index
    %c3_113 = arith.constant 3 : index
    %87 = vector.load %arg4[%c11, %c3_113] : memref<22x22xf32, #tpu.memory_space<vmem>>, vector<1x16xf32>
    tpu.vector_store %arg4[%c11, %c3_113], %86 {strides = array<i32>} : memref<22x22xf32, #tpu.memory_space<vmem>>, vector<1x16xf32>,
    %88 = vector.extract_strided_slice %67 {offsets = [0, 144], sizes = [1, 16], strides = [1, 1]} : vector<1x256xf32> to vector<1x16xf32>
    %c12 = arith.constant 12 : index
    %c3_114 = arith.constant 3 : index
    %89 = vector.load %arg4[%c12, %c3_114] : memref<22x22xf32, #tpu.memory_space<vmem>>, vector<1x16xf32>
    tpu.vector_store %arg4[%c12, %c3_114], %88 {strides = array<i32>} : memref<22x22xf32, #tpu.memory_space<vmem>>, vector<1x16xf32>,
    %90 = vector.extract_strided_slice %67 {offsets = [0, 160], sizes = [1, 16], strides = [1, 1]} : vector<1x256xf32> to vector<1x16xf32>
    %c13 = arith.constant 13 : index
    %c3_115 = arith.constant 3 : index
    %91 = vector.load %arg4[%c13, %c3_115] : memref<22x22xf32, #tpu.memory_space<vmem>>, vector<1x16xf32>
    tpu.vector_store %arg4[%c13, %c3_115], %90 {strides = array<i32>} : memref<22x22xf32, #tpu.memory_space<vmem>>, vector<1x16xf32>,
    %92 = vector.extract_strided_slice %67 {offsets = [0, 176], sizes = [1, 16], strides = [1, 1]} : vector<1x256xf32> to vector<1x16xf32>
    %c14 = arith.constant 14 : index
    %c3_116 = arith.constant 3 : index
    %93 = vector.load %arg4[%c14, %c3_116] : memref<22x22xf32, #tpu.memory_space<vmem>>, vector<1x16xf32>
    tpu.vector_store %arg4[%c14, %c3_116], %92 {strides = array<i32>} : memref<22x22xf32, #tpu.memory_space<vmem>>, vector<1x16xf32>,
    %94 = vector.extract_strided_slice %67 {offsets = [0, 192], sizes = [1, 16], strides = [1, 1]} : vector<1x256xf32> to vector<1x16xf32>
    %c15 = arith.constant 15 : index
    %c3_117 = arith.constant 3 : index
    %95 = vector.load %arg4[%c15, %c3_117] : memref<22x22xf32, #tpu.memory_space<vmem>>, vector<1x16xf32>
    tpu.vector_store %arg4[%c15, %c3_117], %94 {strides = array<i32>} : memref<22x22xf32, #tpu.memory_space<vmem>>, vector<1x16xf32>,
    %96 = vector.extract_strided_slice %67 {offsets = [0, 208], sizes = [1, 16], strides = [1, 1]} : vector<1x256xf32> to vector<1x16xf32>
    %c16 = arith.constant 16 : index
    %c3_118 = arith.constant 3 : index
    %97 = vector.load %arg4[%c16, %c3_118] : memref<22x22xf32, #tpu.memory_space<vmem>>, vector<1x16xf32>
    tpu.vector_store %arg4[%c16, %c3_118], %96 {strides = array<i32>} : memref<22x22xf32, #tpu.memory_space<vmem>>, vector<1x16xf32>,
    %98 = vector.extract_strided_slice %67 {offsets = [0, 224], sizes = [1, 16], strides = [1, 1]} : vector<1x256xf32> to vector<1x16xf32>
    %c17 = arith.constant 17 : index
    %c3_119 = arith.constant 3 : index
    %99 = vector.load %arg4[%c17, %c3_119] : memref<22x22xf32, #tpu.memory_space<vmem>>, vector<1x16xf32>
    tpu.vector_store %arg4[%c17, %c3_119], %98 {strides = array<i32>} : memref<22x22xf32, #tpu.memory_space<vmem>>, vector<1x16xf32>,
    %100 = vector.extract_strided_slice %67 {offsets = [0, 240], sizes = [1, 16], strides = [1, 1]} : vector<1x256xf32> to vector<1x16xf32>
    %c18 = arith.constant 18 : index
    %c3_120 = arith.constant 3 : index
    %101 = vector.load %arg4[%c18, %c3_120] : memref<22x22xf32, #tpu.memory_space<vmem>>, vector<1x16xf32>
    tpu.vector_store %arg4[%c18, %c3_120], %100 {strides = array<i32>} : memref<22x22xf32, #tpu.memory_space<vmem>>, vector<1x16xf32>,
    %c0_121 = arith.constant 0 : index
    %c0_122 = arith.constant 0 : index
    %102 = vector.load %arg4[%c0_121, %c0_122] : memref<22x22xf32, #tpu.memory_space<vmem>>, vector<22x16xf32>
    %c0_123 = arith.constant 0 : index
    %c0_124 = arith.constant 0 : index
    %c0_125 = arith.constant 0 : index
    %103 = vector.load %arg5[%c0_123, %c0_124, %c0_125] : memref<7x22x16xf32, #tpu.memory_space<vmem>>, vector<1x22x16xf32>
    %104 = vector.shape_cast %103 : vector<1x22x16xf32> to vector<22x16xf32>
    %105 = vector.shape_cast %102 : vector<22x16xf32> to vector<1x22x16xf32>
    tpu.vector_store %arg5[%c0_123, %c0_124, %c0_125], %105 {strides = array<i32>} : memref<7x22x16xf32, #tpu.memory_space<vmem>>, vector<1x22x16xf32>,
    %c0_126 = arith.constant 0 : index
    %c1_127 = arith.constant 1 : index
    %106 = vector.load %arg4[%c0_126, %c1_127] : memref<22x22xf32, #tpu.memory_space<vmem>>, vector<22x16xf32>
    %c1_128 = arith.constant 1 : index
    %c0_129 = arith.constant 0 : index
    %c0_130 = arith.constant 0 : index
    %107 = vector.load %arg5[%c1_128, %c0_129, %c0_130] : memref<7x22x16xf32, #tpu.memory_space<vmem>>, vector<1x22x16xf32>
    %108 = vector.shape_cast %107 : vector<1x22x16xf32> to vector<22x16xf32>
    %109 = vector.shape_cast %106 : vector<22x16xf32> to vector<1x22x16xf32>
    tpu.vector_store %arg5[%c1_128, %c0_129, %c0_130], %109 {strides = array<i32>} : memref<7x22x16xf32, #tpu.memory_space<vmem>>, vector<1x22x16xf32>,
    %c0_131 = arith.constant 0 : index
    %c2_132 = arith.constant 2 : index
    %110 = vector.load %arg4[%c0_131, %c2_132] : memref<22x22xf32, #tpu.memory_space<vmem>>, vector<22x16xf32>
    %c2_133 = arith.constant 2 : index
    %c0_134 = arith.constant 0 : index
    %c0_135 = arith.constant 0 : index
    %111 = vector.load %arg5[%c2_133, %c0_134, %c0_135] : memref<7x22x16xf32, #tpu.memory_space<vmem>>, vector<1x22x16xf32>
    %112 = vector.shape_cast %111 : vector<1x22x16xf32> to vector<22x16xf32>
    %113 = vector.shape_cast %110 : vector<22x16xf32> to vector<1x22x16xf32>
    tpu.vector_store %arg5[%c2_133, %c0_134, %c0_135], %113 {strides = array<i32>} : memref<7x22x16xf32, #tpu.memory_space<vmem>>, vector<1x22x16xf32>,
    %c0_136 = arith.constant 0 : index
    %c3_137 = arith.constant 3 : index
    %114 = vector.load %arg4[%c0_136, %c3_137] : memref<22x22xf32, #tpu.memory_space<vmem>>, vector<22x16xf32>
    %c3_138 = arith.constant 3 : index
    %c0_139 = arith.constant 0 : index
    %c0_140 = arith.constant 0 : index
    %115 = vector.load %arg5[%c3_138, %c0_139, %c0_140] : memref<7x22x16xf32, #tpu.memory_space<vmem>>, vector<1x22x16xf32>
    %116 = vector.shape_cast %115 : vector<1x22x16xf32> to vector<22x16xf32>
    %117 = vector.shape_cast %114 : vector<22x16xf32> to vector<1x22x16xf32>
    tpu.vector_store %arg5[%c3_138, %c0_139, %c0_140], %117 {strides = array<i32>} : memref<7x22x16xf32, #tpu.memory_space<vmem>>, vector<1x22x16xf32>,
    %c0_141 = arith.constant 0 : index
    %c4_142 = arith.constant 4 : index
    %118 = vector.load %arg4[%c0_141, %c4_142] : memref<22x22xf32, #tpu.memory_space<vmem>>, vector<22x16xf32>
    %c4_143 = arith.constant 4 : index
    %c0_144 = arith.constant 0 : index
    %c0_145 = arith.constant 0 : index
    %119 = vector.load %arg5[%c4_143, %c0_144, %c0_145] : memref<7x22x16xf32, #tpu.memory_space<vmem>>, vector<1x22x16xf32>
    %120 = vector.shape_cast %119 : vector<1x22x16xf32> to vector<22x16xf32>
    %121 = vector.shape_cast %118 : vector<22x16xf32> to vector<1x22x16xf32>
    tpu.vector_store %arg5[%c4_143, %c0_144, %c0_145], %121 {strides = array<i32>} : memref<7x22x16xf32, #tpu.memory_space<vmem>>, vector<1x22x16xf32>,
    %c0_146 = arith.constant 0 : index
    %c5_147 = arith.constant 5 : index
    %122 = vector.load %arg4[%c0_146, %c5_147] : memref<22x22xf32, #tpu.memory_space<vmem>>, vector<22x16xf32>
    %c5_148 = arith.constant 5 : index
    %c0_149 = arith.constant 0 : index
    %c0_150 = arith.constant 0 : index
    %123 = vector.load %arg5[%c5_148, %c0_149, %c0_150] : memref<7x22x16xf32, #tpu.memory_space<vmem>>, vector<1x22x16xf32>
    %124 = vector.shape_cast %123 : vector<1x22x16xf32> to vector<22x16xf32>
    %125 = vector.shape_cast %122 : vector<22x16xf32> to vector<1x22x16xf32>
    tpu.vector_store %arg5[%c5_148, %c0_149, %c0_150], %125 {strides = array<i32>} : memref<7x22x16xf32, #tpu.memory_space<vmem>>, vector<1x22x16xf32>,
    %c0_151 = arith.constant 0 : index
    %c6_152 = arith.constant 6 : index
    %126 = vector.load %arg4[%c0_151, %c6_152] : memref<22x22xf32, #tpu.memory_space<vmem>>, vector<22x16xf32>
    %c6_153 = arith.constant 6 : index
    %c0_154 = arith.constant 0 : index
    %c0_155 = arith.constant 0 : index
    %127 = vector.load %arg5[%c6_153, %c0_154, %c0_155] : memref<7x22x16xf32, #tpu.memory_space<vmem>>, vector<1x22x16xf32>
    %128 = vector.shape_cast %127 : vector<1x22x16xf32> to vector<22x16xf32>
    %129 = vector.shape_cast %126 : vector<22x16xf32> to vector<1x22x16xf32>
    tpu.vector_store %arg5[%c6_153, %c0_154, %c0_155], %129 {strides = array<i32>} : memref<7x22x16xf32, #tpu.memory_space<vmem>>, vector<1x22x16xf32>,
    %c0_156 = arith.constant 0 : index
    %c0_157 = arith.constant 0 : index
    %c0_158 = arith.constant 0 : index
    %130 = vector.load %arg5[%c0_156, %c0_157, %c0_158] : memref<7x22x16xf32, #tpu.memory_space<vmem>>, vector<1x16x16xf32>
    %131 = vector.shape_cast %130 : vector<1x16x16xf32> to vector<16x16xf32>
    %132 = vector.broadcast %0 : f32 to vector<16x16xf32>
    %133 = arith.mulf %132, %131 : vector<16x16xf32>
    %c1_159 = arith.constant 1 : index
    %c0_160 = arith.constant 0 : index
    %c0_161 = arith.constant 0 : index
    %134 = vector.load %arg5[%c1_159, %c0_160, %c0_161] : memref<7x22x16xf32, #tpu.memory_space<vmem>>, vector<1x16x16xf32>
    %135 = vector.shape_cast %134 : vector<1x16x16xf32> to vector<16x16xf32>
    %136 = vector.broadcast %1 : f32 to vector<16x16xf32>
    %137 = arith.mulf %136, %135 : vector<16x16xf32>
    %138 = arith.addf %133, %137 : vector<16x16xf32>
    %c2_162 = arith.constant 2 : index
    %c0_163 = arith.constant 0 : index
    %c0_164 = arith.constant 0 : index
    %139 = vector.load %arg5[%c2_162, %c0_163, %c0_164] : memref<7x22x16xf32, #tpu.memory_space<vmem>>, vector<1x16x16xf32>
    %140 = vector.shape_cast %139 : vector<1x16x16xf32> to vector<16x16xf32>
    %141 = vector.broadcast %2 : f32 to vector<16x16xf32>
    %142 = arith.mulf %141, %140 : vector<16x16xf32>
    %143 = arith.addf %138, %142 : vector<16x16xf32>
    %c3_165 = arith.constant 3 : index
    %c0_166 = arith.constant 0 : index
    %c0_167 = arith.constant 0 : index
    %144 = vector.load %arg5[%c3_165, %c0_166, %c0_167] : memref<7x22x16xf32, #tpu.memory_space<vmem>>, vector<1x16x16xf32>
    %145 = vector.shape_cast %144 : vector<1x16x16xf32> to vector<16x16xf32>
    %146 = vector.broadcast %3 : f32 to vector<16x16xf32>
    %147 = arith.mulf %146, %145 : vector<16x16xf32>
    %148 = arith.addf %143, %147 : vector<16x16xf32>
    %c4_168 = arith.constant 4 : index
    %c0_169 = arith.constant 0 : index
    %c0_170 = arith.constant 0 : index
    %149 = vector.load %arg5[%c4_168, %c0_169, %c0_170] : memref<7x22x16xf32, #tpu.memory_space<vmem>>, vector<1x16x16xf32>
    %150 = vector.shape_cast %149 : vector<1x16x16xf32> to vector<16x16xf32>
    %151 = vector.broadcast %4 : f32 to vector<16x16xf32>
    %152 = arith.mulf %151, %150 : vector<16x16xf32>
    %153 = arith.addf %148, %152 : vector<16x16xf32>
    %c5_171 = arith.constant 5 : index
    %c0_172 = arith.constant 0 : index
    %c0_173 = arith.constant 0 : index
    %154 = vector.load %arg5[%c5_171, %c0_172, %c0_173] : memref<7x22x16xf32, #tpu.memory_space<vmem>>, vector<1x16x16xf32>
    %155 = vector.shape_cast %154 : vector<1x16x16xf32> to vector<16x16xf32>
    %156 = vector.broadcast %5 : f32 to vector<16x16xf32>
    %157 = arith.mulf %156, %155 : vector<16x16xf32>
    %158 = arith.addf %153, %157 : vector<16x16xf32>
    %c6_174 = arith.constant 6 : index
    %c0_175 = arith.constant 0 : index
    %c0_176 = arith.constant 0 : index
    %159 = vector.load %arg5[%c6_174, %c0_175, %c0_176] : memref<7x22x16xf32, #tpu.memory_space<vmem>>, vector<1x16x16xf32>
    %160 = vector.shape_cast %159 : vector<1x16x16xf32> to vector<16x16xf32>
    %161 = vector.broadcast %6 : f32 to vector<16x16xf32>
    %162 = arith.mulf %161, %160 : vector<16x16xf32>
    %163 = arith.addf %158, %162 : vector<16x16xf32>
    %c0_177 = arith.constant 0 : index
    %c1_178 = arith.constant 1 : index
    %c0_179 = arith.constant 0 : index
    %164 = vector.load %arg5[%c0_177, %c1_178, %c0_179] : memref<7x22x16xf32, #tpu.memory_space<vmem>>, vector<1x16x16xf32>
    %165 = vector.shape_cast %164 : vector<1x16x16xf32> to vector<16x16xf32>
    %166 = vector.broadcast %7 : f32 to vector<16x16xf32>
    %167 = arith.mulf %166, %165 : vector<16x16xf32>
    %c1_180 = arith.constant 1 : index
    %c1_181 = arith.constant 1 : index
    %c0_182 = arith.constant 0 : index
    %168 = vector.load %arg5[%c1_180, %c1_181, %c0_182] : memref<7x22x16xf32, #tpu.memory_space<vmem>>, vector<1x16x16xf32>
    %169 = vector.shape_cast %168 : vector<1x16x16xf32> to vector<16x16xf32>
    %170 = vector.broadcast %8 : f32 to vector<16x16xf32>
    %171 = arith.mulf %170, %169 : vector<16x16xf32>
    %172 = arith.addf %167, %171 : vector<16x16xf32>
    %c2_183 = arith.constant 2 : index
    %c1_184 = arith.constant 1 : index
    %c0_185 = arith.constant 0 : index
    %173 = vector.load %arg5[%c2_183, %c1_184, %c0_185] : memref<7x22x16xf32, #tpu.memory_space<vmem>>, vector<1x16x16xf32>
    %174 = vector.shape_cast %173 : vector<1x16x16xf32> to vector<16x16xf32>
    %175 = vector.broadcast %9 : f32 to vector<16x16xf32>
    %176 = arith.mulf %175, %174 : vector<16x16xf32>
    %177 = arith.addf %172, %176 : vector<16x16xf32>
    %c3_186 = arith.constant 3 : index
    %c1_187 = arith.constant 1 : index
    %c0_188 = arith.constant 0 : index
    %178 = vector.load %arg5[%c3_186, %c1_187, %c0_188] : memref<7x22x16xf32, #tpu.memory_space<vmem>>, vector<1x16x16xf32>
    %179 = vector.shape_cast %178 : vector<1x16x16xf32> to vector<16x16xf32>
    %180 = vector.broadcast %10 : f32 to vector<16x16xf32>
    %181 = arith.mulf %180, %179 : vector<16x16xf32>
    %182 = arith.addf %177, %181 : vector<16x16xf32>
    %c4_189 = arith.constant 4 : index
    %c1_190 = arith.constant 1 : index
    %c0_191 = arith.constant 0 : index
    %183 = vector.load %arg5[%c4_189, %c1_190, %c0_191] : memref<7x22x16xf32, #tpu.memory_space<vmem>>, vector<1x16x16xf32>
    %184 = vector.shape_cast %183 : vector<1x16x16xf32> to vector<16x16xf32>
    %185 = vector.broadcast %11 : f32 to vector<16x16xf32>
    %186 = arith.mulf %185, %184 : vector<16x16xf32>
    %187 = arith.addf %182, %186 : vector<16x16xf32>
    %c5_192 = arith.constant 5 : index
    %c1_193 = arith.constant 1 : index
    %c0_194 = arith.constant 0 : index
    %188 = vector.load %arg5[%c5_192, %c1_193, %c0_194] : memref<7x22x16xf32, #tpu.memory_space<vmem>>, vector<1x16x16xf32>
    %189 = vector.shape_cast %188 : vector<1x16x16xf32> to vector<16x16xf32>
    %190 = vector.broadcast %12 : f32 to vector<16x16xf32>
    %191 = arith.mulf %190, %189 : vector<16x16xf32>
    %192 = arith.addf %187, %191 : vector<16x16xf32>
    %c6_195 = arith.constant 6 : index
    %c1_196 = arith.constant 1 : index
    %c0_197 = arith.constant 0 : index
    %193 = vector.load %arg5[%c6_195, %c1_196, %c0_197] : memref<7x22x16xf32, #tpu.memory_space<vmem>>, vector<1x16x16xf32>
    %194 = vector.shape_cast %193 : vector<1x16x16xf32> to vector<16x16xf32>
    %195 = vector.broadcast %13 : f32 to vector<16x16xf32>
    %196 = arith.mulf %195, %194 : vector<16x16xf32>
    %197 = arith.addf %192, %196 : vector<16x16xf32>
    %c0_198 = arith.constant 0 : index
    %c2_199 = arith.constant 2 : index
    %c0_200 = arith.constant 0 : index
    %198 = vector.load %arg5[%c0_198, %c2_199, %c0_200] : memref<7x22x16xf32, #tpu.memory_space<vmem>>, vector<1x16x16xf32>
    %199 = vector.shape_cast %198 : vector<1x16x16xf32> to vector<16x16xf32>
    %200 = vector.broadcast %14 : f32 to vector<16x16xf32>
    %201 = arith.mulf %200, %199 : vector<16x16xf32>
    %c1_201 = arith.constant 1 : index
    %c2_202 = arith.constant 2 : index
    %c0_203 = arith.constant 0 : index
    %202 = vector.load %arg5[%c1_201, %c2_202, %c0_203] : memref<7x22x16xf32, #tpu.memory_space<vmem>>, vector<1x16x16xf32>
    %203 = vector.shape_cast %202 : vector<1x16x16xf32> to vector<16x16xf32>
    %204 = vector.broadcast %15 : f32 to vector<16x16xf32>
    %205 = arith.mulf %204, %203 : vector<16x16xf32>
    %206 = arith.addf %201, %205 : vector<16x16xf32>
    %c2_204 = arith.constant 2 : index
    %c2_205 = arith.constant 2 : index
    %c0_206 = arith.constant 0 : index
    %207 = vector.load %arg5[%c2_204, %c2_205, %c0_206] : memref<7x22x16xf32, #tpu.memory_space<vmem>>, vector<1x16x16xf32>
    %208 = vector.shape_cast %207 : vector<1x16x16xf32> to vector<16x16xf32>
    %209 = vector.broadcast %16 : f32 to vector<16x16xf32>
    %210 = arith.mulf %209, %208 : vector<16x16xf32>
    %211 = arith.addf %206, %210 : vector<16x16xf32>
    %c3_207 = arith.constant 3 : index
    %c2_208 = arith.constant 2 : index
    %c0_209 = arith.constant 0 : index
    %212 = vector.load %arg5[%c3_207, %c2_208, %c0_209] : memref<7x22x16xf32, #tpu.memory_space<vmem>>, vector<1x16x16xf32>
    %213 = vector.shape_cast %212 : vector<1x16x16xf32> to vector<16x16xf32>
    %214 = vector.broadcast %17 : f32 to vector<16x16xf32>
    %215 = arith.mulf %214, %213 : vector<16x16xf32>
    %216 = arith.addf %211, %215 : vector<16x16xf32>
    %c4_210 = arith.constant 4 : index
    %c2_211 = arith.constant 2 : index
    %c0_212 = arith.constant 0 : index
    %217 = vector.load %arg5[%c4_210, %c2_211, %c0_212] : memref<7x22x16xf32, #tpu.memory_space<vmem>>, vector<1x16x16xf32>
    %218 = vector.shape_cast %217 : vector<1x16x16xf32> to vector<16x16xf32>
    %219 = vector.broadcast %18 : f32 to vector<16x16xf32>
    %220 = arith.mulf %219, %218 : vector<16x16xf32>
    %221 = arith.addf %216, %220 : vector<16x16xf32>
    %c5_213 = arith.constant 5 : index
    %c2_214 = arith.constant 2 : index
    %c0_215 = arith.constant 0 : index
    %222 = vector.load %arg5[%c5_213, %c2_214, %c0_215] : memref<7x22x16xf32, #tpu.memory_space<vmem>>, vector<1x16x16xf32>
    %223 = vector.shape_cast %222 : vector<1x16x16xf32> to vector<16x16xf32>
    %224 = vector.broadcast %19 : f32 to vector<16x16xf32>
    %225 = arith.mulf %224, %223 : vector<16x16xf32>
    %226 = arith.addf %221, %225 : vector<16x16xf32>
    %c6_216 = arith.constant 6 : index
    %c2_217 = arith.constant 2 : index
    %c0_218 = arith.constant 0 : index
    %227 = vector.load %arg5[%c6_216, %c2_217, %c0_218] : memref<7x22x16xf32, #tpu.memory_space<vmem>>, vector<1x16x16xf32>
    %228 = vector.shape_cast %227 : vector<1x16x16xf32> to vector<16x16xf32>
    %229 = vector.broadcast %20 : f32 to vector<16x16xf32>
    %230 = arith.mulf %229, %228 : vector<16x16xf32>
    %231 = arith.addf %226, %230 : vector<16x16xf32>
    %c0_219 = arith.constant 0 : index
    %c3_220 = arith.constant 3 : index
    %c0_221 = arith.constant 0 : index
    %232 = vector.load %arg5[%c0_219, %c3_220, %c0_221] : memref<7x22x16xf32, #tpu.memory_space<vmem>>, vector<1x16x16xf32>
    %233 = vector.shape_cast %232 : vector<1x16x16xf32> to vector<16x16xf32>
    %234 = vector.broadcast %21 : f32 to vector<16x16xf32>
    %235 = arith.mulf %234, %233 : vector<16x16xf32>
    %c1_222 = arith.constant 1 : index
    %c3_223 = arith.constant 3 : index
    %c0_224 = arith.constant 0 : index
    %236 = vector.load %arg5[%c1_222, %c3_223, %c0_224] : memref<7x22x16xf32, #tpu.memory_space<vmem>>, vector<1x16x16xf32>
    %237 = vector.shape_cast %236 : vector<1x16x16xf32> to vector<16x16xf32>
    %238 = vector.broadcast %22 : f32 to vector<16x16xf32>
    %239 = arith.mulf %238, %237 : vector<16x16xf32>
    %240 = arith.addf %235, %239 : vector<16x16xf32>
    %c2_225 = arith.constant 2 : index
    %c3_226 = arith.constant 3 : index
    %c0_227 = arith.constant 0 : index
    %241 = vector.load %arg5[%c2_225, %c3_226, %c0_227] : memref<7x22x16xf32, #tpu.memory_space<vmem>>, vector<1x16x16xf32>
    %242 = vector.shape_cast %241 : vector<1x16x16xf32> to vector<16x16xf32>
    %243 = vector.broadcast %23 : f32 to vector<16x16xf32>
    %244 = arith.mulf %243, %242 : vector<16x16xf32>
    %245 = arith.addf %240, %244 : vector<16x16xf32>
    %c3_228 = arith.constant 3 : index
    %c3_229 = arith.constant 3 : index
    %c0_230 = arith.constant 0 : index
    %246 = vector.load %arg5[%c3_228, %c3_229, %c0_230] : memref<7x22x16xf32, #tpu.memory_space<vmem>>, vector<1x16x16xf32>
    %247 = vector.shape_cast %246 : vector<1x16x16xf32> to vector<16x16xf32>
    %248 = vector.broadcast %24 : f32 to vector<16x16xf32>
    %249 = arith.mulf %248, %247 : vector<16x16xf32>
    %250 = arith.addf %245, %249 : vector<16x16xf32>
    %c4_231 = arith.constant 4 : index
    %c3_232 = arith.constant 3 : index
    %c0_233 = arith.constant 0 : index
    %251 = vector.load %arg5[%c4_231, %c3_232, %c0_233] : memref<7x22x16xf32, #tpu.memory_space<vmem>>, vector<1x16x16xf32>
    %252 = vector.shape_cast %251 : vector<1x16x16xf32> to vector<16x16xf32>
    %253 = vector.broadcast %25 : f32 to vector<16x16xf32>
    %254 = arith.mulf %253, %252 : vector<16x16xf32>
    %255 = arith.addf %250, %254 : vector<16x16xf32>
    %c5_234 = arith.constant 5 : index
    %c3_235 = arith.constant 3 : index
    %c0_236 = arith.constant 0 : index
    %256 = vector.load %arg5[%c5_234, %c3_235, %c0_236] : memref<7x22x16xf32, #tpu.memory_space<vmem>>, vector<1x16x16xf32>
    %257 = vector.shape_cast %256 : vector<1x16x16xf32> to vector<16x16xf32>
    %258 = vector.broadcast %26 : f32 to vector<16x16xf32>
    %259 = arith.mulf %258, %257 : vector<16x16xf32>
    %260 = arith.addf %255, %259 : vector<16x16xf32>
    %c6_237 = arith.constant 6 : index
    %c3_238 = arith.constant 3 : index
    %c0_239 = arith.constant 0 : index
    %261 = vector.load %arg5[%c6_237, %c3_238, %c0_239] : memref<7x22x16xf32, #tpu.memory_space<vmem>>, vector<1x16x16xf32>
    %262 = vector.shape_cast %261 : vector<1x16x16xf32> to vector<16x16xf32>
    %263 = vector.broadcast %27 : f32 to vector<16x16xf32>
    %264 = arith.mulf %263, %262 : vector<16x16xf32>
    %265 = arith.addf %260, %264 : vector<16x16xf32>
    %c0_240 = arith.constant 0 : index
    %c4_241 = arith.constant 4 : index
    %c0_242 = arith.constant 0 : index
    %266 = vector.load %arg5[%c0_240, %c4_241, %c0_242] : memref<7x22x16xf32, #tpu.memory_space<vmem>>, vector<1x16x16xf32>
    %267 = vector.shape_cast %266 : vector<1x16x16xf32> to vector<16x16xf32>
    %268 = vector.broadcast %28 : f32 to vector<16x16xf32>
    %269 = arith.mulf %268, %267 : vector<16x16xf32>
    %c1_243 = arith.constant 1 : index
    %c4_244 = arith.constant 4 : index
    %c0_245 = arith.constant 0 : index
    %270 = vector.load %arg5[%c1_243, %c4_244, %c0_245] : memref<7x22x16xf32, #tpu.memory_space<vmem>>, vector<1x16x16xf32>
    %271 = vector.shape_cast %270 : vector<1x16x16xf32> to vector<16x16xf32>
    %272 = vector.broadcast %29 : f32 to vector<16x16xf32>
    %273 = arith.mulf %272, %271 : vector<16x16xf32>
    %274 = arith.addf %269, %273 : vector<16x16xf32>
    %c2_246 = arith.constant 2 : index
    %c4_247 = arith.constant 4 : index
    %c0_248 = arith.constant 0 : index
    %275 = vector.load %arg5[%c2_246, %c4_247, %c0_248] : memref<7x22x16xf32, #tpu.memory_space<vmem>>, vector<1x16x16xf32>
    %276 = vector.shape_cast %275 : vector<1x16x16xf32> to vector<16x16xf32>
    %277 = vector.broadcast %30 : f32 to vector<16x16xf32>
    %278 = arith.mulf %277, %276 : vector<16x16xf32>
    %279 = arith.addf %274, %278 : vector<16x16xf32>
    %c3_249 = arith.constant 3 : index
    %c4_250 = arith.constant 4 : index
    %c0_251 = arith.constant 0 : index
    %280 = vector.load %arg5[%c3_249, %c4_250, %c0_251] : memref<7x22x16xf32, #tpu.memory_space<vmem>>, vector<1x16x16xf32>
    %281 = vector.shape_cast %280 : vector<1x16x16xf32> to vector<16x16xf32>
    %282 = vector.broadcast %31 : f32 to vector<16x16xf32>
    %283 = arith.mulf %282, %281 : vector<16x16xf32>
    %284 = arith.addf %279, %283 : vector<16x16xf32>
    %c4_252 = arith.constant 4 : index
    %c4_253 = arith.constant 4 : index
    %c0_254 = arith.constant 0 : index
    %285 = vector.load %arg5[%c4_252, %c4_253, %c0_254] : memref<7x22x16xf32, #tpu.memory_space<vmem>>, vector<1x16x16xf32>
    %286 = vector.shape_cast %285 : vector<1x16x16xf32> to vector<16x16xf32>
    %287 = vector.broadcast %32 : f32 to vector<16x16xf32>
    %288 = arith.mulf %287, %286 : vector<16x16xf32>
    %289 = arith.addf %284, %288 : vector<16x16xf32>
    %c5_255 = arith.constant 5 : index
    %c4_256 = arith.constant 4 : index
    %c0_257 = arith.constant 0 : index
    %290 = vector.load %arg5[%c5_255, %c4_256, %c0_257] : memref<7x22x16xf32, #tpu.memory_space<vmem>>, vector<1x16x16xf32>
    %291 = vector.shape_cast %290 : vector<1x16x16xf32> to vector<16x16xf32>
    %292 = vector.broadcast %33 : f32 to vector<16x16xf32>
    %293 = arith.mulf %292, %291 : vector<16x16xf32>
    %294 = arith.addf %289, %293 : vector<16x16xf32>
    %c6_258 = arith.constant 6 : index
    %c4_259 = arith.constant 4 : index
    %c0_260 = arith.constant 0 : index
    %295 = vector.load %arg5[%c6_258, %c4_259, %c0_260] : memref<7x22x16xf32, #tpu.memory_space<vmem>>, vector<1x16x16xf32>
    %296 = vector.shape_cast %295 : vector<1x16x16xf32> to vector<16x16xf32>
    %297 = vector.broadcast %34 : f32 to vector<16x16xf32>
    %298 = arith.mulf %297, %296 : vector<16x16xf32>
    %299 = arith.addf %294, %298 : vector<16x16xf32>
    %c0_261 = arith.constant 0 : index
    %c5_262 = arith.constant 5 : index
    %c0_263 = arith.constant 0 : index
    %300 = vector.load %arg5[%c0_261, %c5_262, %c0_263] : memref<7x22x16xf32, #tpu.memory_space<vmem>>, vector<1x16x16xf32>
    %301 = vector.shape_cast %300 : vector<1x16x16xf32> to vector<16x16xf32>
    %302 = vector.broadcast %35 : f32 to vector<16x16xf32>
    %303 = arith.mulf %302, %301 : vector<16x16xf32>
    %c1_264 = arith.constant 1 : index
    %c5_265 = arith.constant 5 : index
    %c0_266 = arith.constant 0 : index
    %304 = vector.load %arg5[%c1_264, %c5_265, %c0_266] : memref<7x22x16xf32, #tpu.memory_space<vmem>>, vector<1x16x16xf32>
    %305 = vector.shape_cast %304 : vector<1x16x16xf32> to vector<16x16xf32>
    %306 = vector.broadcast %36 : f32 to vector<16x16xf32>
    %307 = arith.mulf %306, %305 : vector<16x16xf32>
    %308 = arith.addf %303, %307 : vector<16x16xf32>
    %c2_267 = arith.constant 2 : index
    %c5_268 = arith.constant 5 : index
    %c0_269 = arith.constant 0 : index
    %309 = vector.load %arg5[%c2_267, %c5_268, %c0_269] : memref<7x22x16xf32, #tpu.memory_space<vmem>>, vector<1x16x16xf32>
    %310 = vector.shape_cast %309 : vector<1x16x16xf32> to vector<16x16xf32>
    %311 = vector.broadcast %37 : f32 to vector<16x16xf32>
    %312 = arith.mulf %311, %310 : vector<16x16xf32>
    %313 = arith.addf %308, %312 : vector<16x16xf32>
    %c3_270 = arith.constant 3 : index
    %c5_271 = arith.constant 5 : index
    %c0_272 = arith.constant 0 : index
    %314 = vector.load %arg5[%c3_270, %c5_271, %c0_272] : memref<7x22x16xf32, #tpu.memory_space<vmem>>, vector<1x16x16xf32>
    %315 = vector.shape_cast %314 : vector<1x16x16xf32> to vector<16x16xf32>
    %316 = vector.broadcast %38 : f32 to vector<16x16xf32>
    %317 = arith.mulf %316, %315 : vector<16x16xf32>
    %318 = arith.addf %313, %317 : vector<16x16xf32>
    %c4_273 = arith.constant 4 : index
    %c5_274 = arith.constant 5 : index
    %c0_275 = arith.constant 0 : index
    %319 = vector.load %arg5[%c4_273, %c5_274, %c0_275] : memref<7x22x16xf32, #tpu.memory_space<vmem>>, vector<1x16x16xf32>
    %320 = vector.shape_cast %319 : vector<1x16x16xf32> to vector<16x16xf32>
    %321 = vector.broadcast %39 : f32 to vector<16x16xf32>
    %322 = arith.mulf %321, %320 : vector<16x16xf32>
    %323 = arith.addf %318, %322 : vector<16x16xf32>
    %c5_276 = arith.constant 5 : index
    %c5_277 = arith.constant 5 : index
    %c0_278 = arith.constant 0 : index
    %324 = vector.load %arg5[%c5_276, %c5_277, %c0_278] : memref<7x22x16xf32, #tpu.memory_space<vmem>>, vector<1x16x16xf32>
    %325 = vector.shape_cast %324 : vector<1x16x16xf32> to vector<16x16xf32>
    %326 = vector.broadcast %40 : f32 to vector<16x16xf32>
    %327 = arith.mulf %326, %325 : vector<16x16xf32>
    %328 = arith.addf %323, %327 : vector<16x16xf32>
    %c6_279 = arith.constant 6 : index
    %c5_280 = arith.constant 5 : index
    %c0_281 = arith.constant 0 : index
    %329 = vector.load %arg5[%c6_279, %c5_280, %c0_281] : memref<7x22x16xf32, #tpu.memory_space<vmem>>, vector<1x16x16xf32>
    %330 = vector.shape_cast %329 : vector<1x16x16xf32> to vector<16x16xf32>
    %331 = vector.broadcast %41 : f32 to vector<16x16xf32>
    %332 = arith.mulf %331, %330 : vector<16x16xf32>
    %333 = arith.addf %328, %332 : vector<16x16xf32>
    %c0_282 = arith.constant 0 : index
    %c6_283 = arith.constant 6 : index
    %c0_284 = arith.constant 0 : index
    %334 = vector.load %arg5[%c0_282, %c6_283, %c0_284] : memref<7x22x16xf32, #tpu.memory_space<vmem>>, vector<1x16x16xf32>
    %335 = vector.shape_cast %334 : vector<1x16x16xf32> to vector<16x16xf32>
    %336 = vector.broadcast %42 : f32 to vector<16x16xf32>
    %337 = arith.mulf %336, %335 : vector<16x16xf32>
    %c1_285 = arith.constant 1 : index
    %c6_286 = arith.constant 6 : index
    %c0_287 = arith.constant 0 : index
    %338 = vector.load %arg5[%c1_285, %c6_286, %c0_287] : memref<7x22x16xf32, #tpu.memory_space<vmem>>, vector<1x16x16xf32>
    %339 = vector.shape_cast %338 : vector<1x16x16xf32> to vector<16x16xf32>
    %340 = vector.broadcast %43 : f32 to vector<16x16xf32>
    %341 = arith.mulf %340, %339 : vector<16x16xf32>
    %342 = arith.addf %337, %341 : vector<16x16xf32>
    %c2_288 = arith.constant 2 : index
    %c6_289 = arith.constant 6 : index
    %c0_290 = arith.constant 0 : index
    %343 = vector.load %arg5[%c2_288, %c6_289, %c0_290] : memref<7x22x16xf32, #tpu.memory_space<vmem>>, vector<1x16x16xf32>
    %344 = vector.shape_cast %343 : vector<1x16x16xf32> to vector<16x16xf32>
    %345 = vector.broadcast %44 : f32 to vector<16x16xf32>
    %346 = arith.mulf %345, %344 : vector<16x16xf32>
    %347 = arith.addf %342, %346 : vector<16x16xf32>
    %c3_291 = arith.constant 3 : index
    %c6_292 = arith.constant 6 : index
    %c0_293 = arith.constant 0 : index
    %348 = vector.load %arg5[%c3_291, %c6_292, %c0_293] : memref<7x22x16xf32, #tpu.memory_space<vmem>>, vector<1x16x16xf32>
    %349 = vector.shape_cast %348 : vector<1x16x16xf32> to vector<16x16xf32>
    %350 = vector.broadcast %45 : f32 to vector<16x16xf32>
    %351 = arith.mulf %350, %349 : vector<16x16xf32>
    %352 = arith.addf %347, %351 : vector<16x16xf32>
    %c4_294 = arith.constant 4 : index
    %c6_295 = arith.constant 6 : index
    %c0_296 = arith.constant 0 : index
    %353 = vector.load %arg5[%c4_294, %c6_295, %c0_296] : memref<7x22x16xf32, #tpu.memory_space<vmem>>, vector<1x16x16xf32>
    %354 = vector.shape_cast %353 : vector<1x16x16xf32> to vector<16x16xf32>
    %355 = vector.broadcast %46 : f32 to vector<16x16xf32>
    %356 = arith.mulf %355, %354 : vector<16x16xf32>
    %357 = arith.addf %352, %356 : vector<16x16xf32>
    %c5_297 = arith.constant 5 : index
    %c6_298 = arith.constant 6 : index
    %c0_299 = arith.constant 0 : index
    %358 = vector.load %arg5[%c5_297, %c6_298, %c0_299] : memref<7x22x16xf32, #tpu.memory_space<vmem>>, vector<1x16x16xf32>
    %359 = vector.shape_cast %358 : vector<1x16x16xf32> to vector<16x16xf32>
    %360 = vector.broadcast %47 : f32 to vector<16x16xf32>
    %361 = arith.mulf %360, %359 : vector<16x16xf32>
    %362 = arith.addf %357, %361 : vector<16x16xf32>
    %c6_300 = arith.constant 6 : index
    %c6_301 = arith.constant 6 : index
    %c0_302 = arith.constant 0 : index
    %363 = vector.load %arg5[%c6_300, %c6_301, %c0_302] : memref<7x22x16xf32, #tpu.memory_space<vmem>>, vector<1x16x16xf32>
    %364 = vector.shape_cast %363 : vector<1x16x16xf32> to vector<16x16xf32>
    %365 = vector.broadcast %48 : f32 to vector<16x16xf32>
    %366 = arith.mulf %365, %364 : vector<16x16xf32>
    %367 = arith.addf %362, %366 : vector<16x16xf32>
    %368 = arith.addf %163, %197 : vector<16x16xf32>
    %369 = arith.addf %231, %265 : vector<16x16xf32>
    %370 = arith.addf %368, %369 : vector<16x16xf32>
    %371 = arith.addf %299, %333 : vector<16x16xf32>
    %372 = arith.addf %371, %367 : vector<16x16xf32>
    %373 = arith.addf %370, %372 : vector<16x16xf32>
    %374 = arith.negf %373 : vector<16x16xf32>
    %375 = math.exp %374 : vector<16x16xf32>
    %cst_303 = arith.constant 1.000000e+00 : f32
    %376 = vector.broadcast %cst_303 : f32 to vector<16x16xf32>
    %377 = arith.addf %376, %375 : vector<16x16xf32>
    %378 = arith.divf %376, %377 : vector<16x16xf32>
    %c0_304 = arith.constant 0 : index
    %c0_305 = arith.constant 0 : index
    %379 = vector.load %arg6[%c0_304, %c0_305] : memref<16x16xf32, #tpu.memory_space<vmem>>, vector<16x16xf32>
    tpu.vector_store %arg6[%c0_304, %c0_305], %378 {strides = array<i32>} : memref<16x16xf32, #tpu.memory_space<vmem>>, vector<16x16xf32>,
    %c0_306 = arith.constant 0 : index
    %c0_307 = arith.constant 0 : index
    %380 = vector.load %arg6[%c0_306, %c0_307] : memref<16x16xf32, #tpu.memory_space<vmem>>, vector<1x16xf32>
    %c0_308 = arith.constant 0 : index
    %c0_309 = arith.constant 0 : index
    %381 = vector.load %arg7[%c0_308, %c0_309] : memref<1x256xf32, #tpu.memory_space<vmem>>, vector<1x16xf32>
    tpu.vector_store %arg7[%c0_308, %c0_309], %380 {strides = array<i32>} : memref<1x256xf32, #tpu.memory_space<vmem>>, vector<1x16xf32>,
    %c1_310 = arith.constant 1 : index
    %c0_311 = arith.constant 0 : index
    %382 = vector.load %arg6[%c1_310, %c0_311] : memref<16x16xf32, #tpu.memory_space<vmem>>, vector<1x16xf32>
    %c0_312 = arith.constant 0 : index
    %c16_313 = arith.constant 16 : index
    %383 = vector.load %arg7[%c0_312, %c16_313] : memref<1x256xf32, #tpu.memory_space<vmem>>, vector<1x16xf32>
    tpu.vector_store %arg7[%c0_312, %c16_313], %382 {strides = array<i32>} : memref<1x256xf32, #tpu.memory_space<vmem>>, vector<1x16xf32>,
    %c2_314 = arith.constant 2 : index
    %c0_315 = arith.constant 0 : index
    %384 = vector.load %arg6[%c2_314, %c0_315] : memref<16x16xf32, #tpu.memory_space<vmem>>, vector<1x16xf32>
    %c0_316 = arith.constant 0 : index
    %c32 = arith.constant 32 : index
    %385 = vector.load %arg7[%c0_316, %c32] : memref<1x256xf32, #tpu.memory_space<vmem>>, vector<1x16xf32>
    tpu.vector_store %arg7[%c0_316, %c32], %384 {strides = array<i32>} : memref<1x256xf32, #tpu.memory_space<vmem>>, vector<1x16xf32>,
    %c3_317 = arith.constant 3 : index
    %c0_318 = arith.constant 0 : index
    %386 = vector.load %arg6[%c3_317, %c0_318] : memref<16x16xf32, #tpu.memory_space<vmem>>, vector<1x16xf32>
    %c0_319 = arith.constant 0 : index
    %c48 = arith.constant 48 : index
    %387 = vector.load %arg7[%c0_319, %c48] : memref<1x256xf32, #tpu.memory_space<vmem>>, vector<1x16xf32>
    tpu.vector_store %arg7[%c0_319, %c48], %386 {strides = array<i32>} : memref<1x256xf32, #tpu.memory_space<vmem>>, vector<1x16xf32>,
    %c4_320 = arith.constant 4 : index
    %c0_321 = arith.constant 0 : index
    %388 = vector.load %arg6[%c4_320, %c0_321] : memref<16x16xf32, #tpu.memory_space<vmem>>, vector<1x16xf32>
    %c0_322 = arith.constant 0 : index
    %c64 = arith.constant 64 : index
    %389 = vector.load %arg7[%c0_322, %c64] : memref<1x256xf32, #tpu.memory_space<vmem>>, vector<1x16xf32>
    tpu.vector_store %arg7[%c0_322, %c64], %388 {strides = array<i32>} : memref<1x256xf32, #tpu.memory_space<vmem>>, vector<1x16xf32>,
    %c5_323 = arith.constant 5 : index
    %c0_324 = arith.constant 0 : index
    %390 = vector.load %arg6[%c5_323, %c0_324] : memref<16x16xf32, #tpu.memory_space<vmem>>, vector<1x16xf32>
    %c0_325 = arith.constant 0 : index
    %c80 = arith.constant 80 : index
    %391 = vector.load %arg7[%c0_325, %c80] : memref<1x256xf32, #tpu.memory_space<vmem>>, vector<1x16xf32>
    tpu.vector_store %arg7[%c0_325, %c80], %390 {strides = array<i32>} : memref<1x256xf32, #tpu.memory_space<vmem>>, vector<1x16xf32>,
    %c6_326 = arith.constant 6 : index
    %c0_327 = arith.constant 0 : index
    %392 = vector.load %arg6[%c6_326, %c0_327] : memref<16x16xf32, #tpu.memory_space<vmem>>, vector<1x16xf32>
    %c0_328 = arith.constant 0 : index
    %c96 = arith.constant 96 : index
    %393 = vector.load %arg7[%c0_328, %c96] : memref<1x256xf32, #tpu.memory_space<vmem>>, vector<1x16xf32>
    tpu.vector_store %arg7[%c0_328, %c96], %392 {strides = array<i32>} : memref<1x256xf32, #tpu.memory_space<vmem>>, vector<1x16xf32>,
    %c7_329 = arith.constant 7 : index
    %c0_330 = arith.constant 0 : index
    %394 = vector.load %arg6[%c7_329, %c0_330] : memref<16x16xf32, #tpu.memory_space<vmem>>, vector<1x16xf32>
    %c0_331 = arith.constant 0 : index
    %c112 = arith.constant 112 : index
    %395 = vector.load %arg7[%c0_331, %c112] : memref<1x256xf32, #tpu.memory_space<vmem>>, vector<1x16xf32>
    tpu.vector_store %arg7[%c0_331, %c112], %394 {strides = array<i32>} : memref<1x256xf32, #tpu.memory_space<vmem>>, vector<1x16xf32>,
    %c8_332 = arith.constant 8 : index
    %c0_333 = arith.constant 0 : index
    %396 = vector.load %arg6[%c8_332, %c0_333] : memref<16x16xf32, #tpu.memory_space<vmem>>, vector<1x16xf32>
    %c0_334 = arith.constant 0 : index
    %c128 = arith.constant 128 : index
    %397 = vector.load %arg7[%c0_334, %c128] : memref<1x256xf32, #tpu.memory_space<vmem>>, vector<1x16xf32>
    tpu.vector_store %arg7[%c0_334, %c128], %396 {strides = array<i32>} : memref<1x256xf32, #tpu.memory_space<vmem>>, vector<1x16xf32>,
    %c9_335 = arith.constant 9 : index
    %c0_336 = arith.constant 0 : index
    %398 = vector.load %arg6[%c9_335, %c0_336] : memref<16x16xf32, #tpu.memory_space<vmem>>, vector<1x16xf32>
    %c0_337 = arith.constant 0 : index
    %c144 = arith.constant 144 : index
    %399 = vector.load %arg7[%c0_337, %c144] : memref<1x256xf32, #tpu.memory_space<vmem>>, vector<1x16xf32>
    tpu.vector_store %arg7[%c0_337, %c144], %398 {strides = array<i32>} : memref<1x256xf32, #tpu.memory_space<vmem>>, vector<1x16xf32>,
    %c10_338 = arith.constant 10 : index
    %c0_339 = arith.constant 0 : index
    %400 = vector.load %arg6[%c10_338, %c0_339] : memref<16x16xf32, #tpu.memory_space<vmem>>, vector<1x16xf32>
    %c0_340 = arith.constant 0 : index
    %c160 = arith.constant 160 : index
    %401 = vector.load %arg7[%c0_340, %c160] : memref<1x256xf32, #tpu.memory_space<vmem>>, vector<1x16xf32>
    tpu.vector_store %arg7[%c0_340, %c160], %400 {strides = array<i32>} : memref<1x256xf32, #tpu.memory_space<vmem>>, vector<1x16xf32>,
    %c11_341 = arith.constant 11 : index
    %c0_342 = arith.constant 0 : index
    %402 = vector.load %arg6[%c11_341, %c0_342] : memref<16x16xf32, #tpu.memory_space<vmem>>, vector<1x16xf32>
    %c0_343 = arith.constant 0 : index
    %c176 = arith.constant 176 : index
    %403 = vector.load %arg7[%c0_343, %c176] : memref<1x256xf32, #tpu.memory_space<vmem>>, vector<1x16xf32>
    tpu.vector_store %arg7[%c0_343, %c176], %402 {strides = array<i32>} : memref<1x256xf32, #tpu.memory_space<vmem>>, vector<1x16xf32>,
    %c12_344 = arith.constant 12 : index
    %c0_345 = arith.constant 0 : index
    %404 = vector.load %arg6[%c12_344, %c0_345] : memref<16x16xf32, #tpu.memory_space<vmem>>, vector<1x16xf32>
    %c0_346 = arith.constant 0 : index
    %c192 = arith.constant 192 : index
    %405 = vector.load %arg7[%c0_346, %c192] : memref<1x256xf32, #tpu.memory_space<vmem>>, vector<1x16xf32>
    tpu.vector_store %arg7[%c0_346, %c192], %404 {strides = array<i32>} : memref<1x256xf32, #tpu.memory_space<vmem>>, vector<1x16xf32>,
    %c13_347 = arith.constant 13 : index
    %c0_348 = arith.constant 0 : index
    %406 = vector.load %arg6[%c13_347, %c0_348] : memref<16x16xf32, #tpu.memory_space<vmem>>, vector<1x16xf32>
    %c0_349 = arith.constant 0 : index
    %c208 = arith.constant 208 : index
    %407 = vector.load %arg7[%c0_349, %c208] : memref<1x256xf32, #tpu.memory_space<vmem>>, vector<1x16xf32>
    tpu.vector_store %arg7[%c0_349, %c208], %406 {strides = array<i32>} : memref<1x256xf32, #tpu.memory_space<vmem>>, vector<1x16xf32>,
    %c14_350 = arith.constant 14 : index
    %c0_351 = arith.constant 0 : index
    %408 = vector.load %arg6[%c14_350, %c0_351] : memref<16x16xf32, #tpu.memory_space<vmem>>, vector<1x16xf32>
    %c0_352 = arith.constant 0 : index
    %c224 = arith.constant 224 : index
    %409 = vector.load %arg7[%c0_352, %c224] : memref<1x256xf32, #tpu.memory_space<vmem>>, vector<1x16xf32>
    tpu.vector_store %arg7[%c0_352, %c224], %408 {strides = array<i32>} : memref<1x256xf32, #tpu.memory_space<vmem>>, vector<1x16xf32>,
    %c15_353 = arith.constant 15 : index
    %c0_354 = arith.constant 0 : index
    %410 = vector.load %arg6[%c15_353, %c0_354] : memref<16x16xf32, #tpu.memory_space<vmem>>, vector<1x16xf32>
    %c0_355 = arith.constant 0 : index
    %c240 = arith.constant 240 : index
    %411 = vector.load %arg7[%c0_355, %c240] : memref<1x256xf32, #tpu.memory_space<vmem>>, vector<1x16xf32>
    tpu.vector_store %arg7[%c0_355, %c240], %410 {strides = array<i32>} : memref<1x256xf32, #tpu.memory_space<vmem>>, vector<1x16xf32>,
    %c0_356 = arith.constant 0 : index
    %c0_357 = arith.constant 0 : index
    %412 = vector.load %arg7[%c0_356, %c0_357] : memref<1x256xf32, #tpu.memory_space<vmem>>, vector<1x256xf32>
    %413 = vector.shape_cast %412 : vector<1x256xf32> to vector<1x256xf32>
    %414 = vector.broadcast %413 : vector<1x256xf32> to vector<4x256xf32>
    %c0_i32_358 = arith.constant 0 : i32
    %c4_i32_359 = arith.constant 4 : i32
    %415 = arith.muli %c0_i32_358, %c4_i32_359 : i32
    %416 = tpu.assume_multiple %415, 4 : i32
    %417 = arith.index_cast %c0_i32 : i32 to index
    %418 = arith.index_cast %416 : i32 to index
    %c0_360 = arith.constant 0 : index
    %419 = vector.load %arg2[%417, %418, %c0_360] : memref<1x4x256xf32, #tpu.memory_space<vmem>>, vector<1x4x256xf32>
    %420 = vector.shape_cast %419 : vector<1x4x256xf32> to vector<4x256xf32>
    %421 = arith.mulf %420, %414 : vector<4x256xf32>
    %422 = arith.index_cast %c0_i32 : i32 to index
    %423 = arith.index_cast %416 : i32 to index
    %c0_361 = arith.constant 0 : index
    %424 = vector.load %arg3[%422, %423, %c0_361] : memref<1x4x256xf32, #tpu.memory_space<vmem>>, vector<1x4x256xf32>
    %425 = vector.shape_cast %424 : vector<1x4x256xf32> to vector<4x256xf32>
    %426 = vector.shape_cast %421 : vector<4x256xf32> to vector<1x4x256xf32>
    tpu.vector_store %arg3[%422, %423, %c0_361], %426 {strides = array<i32>} : memref<1x4x256xf32, #tpu.memory_space<vmem>>, vector<1x4x256xf32>,
    %c1_i32_362 = arith.constant 1 : i32
    %c1_i32_363 = arith.constant 1 : i32
    return
  }
  func.func @transform_0(%arg0: i32) -> (i32, i32) {
    %c0_i32 = arith.constant 0 : i32
    %c0_i32_0 = arith.constant 0 : i32
    %c0_i32_1 = arith.constant 0 : i32
    return %c0_i32, %c0_i32_0 : i32, i32
  }
  func.func @transform_1(%arg0: i32) -> (i32, i32, i32) {
    %c0_i32 = arith.constant 0 : i32
    %c0_i32_0 = arith.constant 0 : i32
    %c0_i32_1 = arith.constant 0 : i32
    return %arg0, %c0_i32, %c0_i32_0 : i32, i32, i32
  }
  func.func @transform_2(%arg0: i32) -> (i32, i32, i32) {
    %c0_i32 = arith.constant 0 : i32
    %c0_i32_0 = arith.constant 0 : i32
    %c0_i32_1 = arith.constant 0 : i32
    return %arg0, %c0_i32, %c0_i32_0 : i32, i32, i32
  }
}

</mosaic_0001>

<llo_original>
// kernel: light_spatial_attention.1
$region0: #{light_spatial_attention.1}
  #allocation0 [shape = 'u32[]', space=smem, size = 0x4, offset = 0x4, fixed_abs, tag = 'smem constant byte address 0x4 - core index']
  #allocation1 [shape = 'u32[144,128]{1,0:T(1,128)}', space=vmem, size = 0x12000, scoped, tag = 'internal scratch']
  #allocation2 [shape = 'f32[22,22]{1,0:T(8,128)}', space=vmem, size = 0x3000, scoped, tag = 'scratch operand']
  #allocation3 [shape = 'f32[7,22,16]{2,1,0:T(8,128)}', space=vmem, size = 0x15000, scoped, tag = 'scratch operand']
  #allocation4 [shape = 'f32[16,16]{1,0:T(8,128)}', space=vmem, size = 0x2000, scoped, tag = 'scratch operand']
  #allocation5 [shape = 'f32[1,256]{1,0:T(1,128)}', space=vmem, size = 0x400, scoped, tag = 'scratch operand']
  %s0 = inlined_call_operand.vmem [shape: f32[7,7], index: 0, kind: input, shape index: {}]
  %s1 = inlined_call_operand.vmem [shape: f32[2,4,256], index: 1, kind: input, shape index: {}]
  %s2 = inlined_call_operand.vmem [shape: f32[2,4,256], index: 2, kind: output, shape index: {}]
  %s3 = sld [smem:[#allocation0]]
  $region45: #{light_spatial_attention.1} parent=0
    _
  %s5 = ssub.s32 1, %s3
  %s6 = scalar_select 0, %s5, %s3
  $region1: #{light_spatial_attention.1} parent=0
    #allocation6 [shape = 'u8[4096]{0}', space=smem, size = 0x1000, scoped, tag = 'input window, operand 0, single buffered']
    #allocation7 [shape = 's32[2]{0}', space=sflag, size = 0x8, scoped, tag = 'scoped memory for light_spatial_attention.1']
    %7 = vsyncpa [#allocation7], 0
    loop: start=0, step=1, limit=4
    $region2: #{light_spatial_attention.1} parent=1 // loop_pre_header
      _
    $region3: #{light_spatial_attention.1} parent=1 // loop_header
      %s9 = sphi 0, %s13
      %p10 = scmp.ge.s32.totalorder %s9, 4
      %s17 = sphi 0, %s17
      %s19 = sphi 0, %s17
      %s20 = sphi 0, %s19
      %s34 = sphi 0, %s20
      %s40 = sphi 0, %s42
      %s43 = sphi 0, %s40
      %s44 = sphi 0, %s43
      %s60 = sphi 0, %s44
      %s66 = sphi 0, %s68
      %s69 = sphi 0, %s66
      %s70 = sphi 0, %s69
      %s86 = sphi 0, %s70
    $region4: #{light_spatial_attention.1} parent=1 // loop_header_branch
      %12 = sbr.rel (%p10) target = $region8
    $region5: #{light_spatial_attention.1} parent=1 // loop_body
      %s14 = ssub.s32 %s9, 1
      %s15 = ssub.s32 %s9, 2
      %s16 = sadd.s32 %s9, 1
      %s18 = sadd.s32 %s17, 1
      %p21 = scmp.eq.s32.totalorder %s9, 1
      %p22 = scmp.ne.s32.totalorder %s17, %s19
      %p23 = scmp.eq.s32.totalorder %s9, 0
      %p24 = por %p22, %p23
      %p25 = scmp.ne.s32.totalorder %s17, %s19
      %p26 = scmp.eq.s32.totalorder %s14, 1
      %p27 = por %p25, %p26
      %p28 = scmp.ne.s32.totalorder %s19, %s20
      %p29 = scmp.eq.s32.totalorder %s14, 0
      %p30 = por %p28, %p29
      %p31 = scmp.ne.s32.totalorder %s19, %s20
      %p32 = scmp.eq.s32.totalorder %s15, 1
      %p33 = por %p31, %p32
      %p35 = scmp.ne.s32.totalorder %s20, %s34
      %p36 = scmp.eq.s32.totalorder %s15, 0
      %p37 = por %p35, %p36
      %s38 = ssub.s32 %s9, %s16
      %p39 = scmp.eq.s32.totalorder %s38, 0
      %s41 = sadd.s32 %s40, 1
      %s42 = scalar_select %p39, %s40, %s41
      %p45 = pneg %p39
      %p46 = scmp.eq.s32.totalorder %s9, 1
      %p47 = por %p45, %p46
      %p48 = scmp.ne.s32.totalorder %s40, %s43
      %p49 = scmp.eq.s32.totalorder %s9, 0
      %p50 = por %p48, %p49
      %p51 = scmp.ne.s32.totalorder %s40, %s43
      %p52 = scmp.eq.s32.totalorder %s14, 1
      %p53 = por %p51, %p52
      %p54 = scmp.ne.s32.totalorder %s43, %s44
      %p55 = scmp.eq.s32.totalorder %s14, 0
      %p56 = por %p54, %p55
      %p57 = scmp.ne.s32.totalorder %s43, %s44
      %p58 = scmp.eq.s32.totalorder %s15, 1
      %p59 = por %p57, %p58
      %p61 = scmp.ne.s32.totalorder %s44, %s60
      %p62 = scmp.eq.s32.totalorder %s15, 0
      %p63 = por %p61, %p62
      %s64 = ssub.s32 %s9, %s16
      %p65 = scmp.eq.s32.totalorder %s64, 0
      %s67 = sadd.s32 %s66, 1
      %s68 = scalar_select %p65, %s66, %s67
      %p71 = pneg %p65
      %p72 = scmp.eq.s32.totalorder %s9, 1
      %p73 = por %p71, %p72
      %p74 = scmp.ne.s32.totalorder %s66, %s69
      %p75 = scmp.eq.s32.totalorder %s9, 0
      %p76 = por %p74, %p75
      %p77 = scmp.ne.s32.totalorder %s66, %s69
      %p78 = scmp.eq.s32.totalorder %s14, 1
      %p79 = por %p77, %p78
      %p80 = scmp.ne.s32.totalorder %s69, %s70
      %p81 = scmp.eq.s32.totalorder %s14, 0
      %p82 = por %p80, %p81
      %p83 = scmp.ne.s32.totalorder %s69, %s70
      %p84 = scmp.eq.s32.totalorder %s15, 1
      %p85 = por %p83, %p84
      %p87 = scmp.ne.s32.totalorder %s70, %s86
      %p88 = scmp.eq.s32.totalorder %s15, 0
      %p89 = por %p87, %p88
      %p90 = scmp.le.s32.totalorder 1, %s9
      %p91 = scmp.lt.s32.totalorder %s9, 3
      %p92 = pnand %p90, %p91
      %p93 = pneg %p92
      // Predicated region
      $region9: #{light_spatial_attention.1} parent=5 // pred_check
        _
      $region10: #{light_spatial_attention.1} parent=5 // pred_check_branch
        %95 = sbr.rel (%p92) target = $region12
      $region11: #{light_spatial_attention.1} parent=5 // pred_region
        %s96 = ssub.s32 %s9, 1
        // Predicated region
        $region13: #{light_spatial_attention.1} parent=11 // pred_check
          %p97 = pneg %p30
        $region14: #{light_spatial_attention.1} parent=11 // pred_check_branch
          %99 = sbr.rel (%p97) target = $region16
        $region15: #{light_spatial_attention.1} parent=11 // pred_region
          %s101 = ssub.s32 128, 128
          %102 = vsyncadd [#allocation7], %s101
          %s104 = sshll.u32 %s0, 4
          %s105 = int_to_ptr.vmem [resolvable:$true] %s104
          %107 = dma.vmem_to_smem %s105, 128, [#allocation6], [#allocation7]
        $region16: #{light_spatial_attention.1} parent=11 // pred_fallthru
          _
      $region12: #{light_spatial_attention.1} parent=5 // pred_fallthru
        _
      %p108 = scmp.lt.s32.totalorder %s9, 2
      // Predicated region
      $region17: #{light_spatial_attention.1} parent=5 // pred_check
        %p109 = pneg %p108
      $region18: #{light_spatial_attention.1} parent=5 // pred_check_branch
        %111 = sbr.rel (%p109) target = $region20
      $region19: #{light_spatial_attention.1} parent=5 // pred_region
        // Predicated region
        $region21: #{light_spatial_attention.1} parent=19 // pred_check
          %p112 = pneg %p50
        $region22: #{light_spatial_attention.1} parent=19 // pred_check_branch
          %114 = sbr.rel (%p112) target = $region24
        $region23: #{light_spatial_attention.1} parent=19 // pred_region
          %p115 = scmp.lt.s32.totalorder %s9, 1
          %s116 = scalar_select %p115, %s9, 1
          %s117 = smul.addr %s116, 2
          %s118 = smul.addr %s117, 4
          %s119 = scalar_lea.vmem %s1, %s118
        $region24: #{light_spatial_attention.1} parent=19 // pred_fallthru
          _
      $region20: #{light_spatial_attention.1} parent=5 // pred_fallthru
        _
      %p120 = scmp.le.s32.totalorder 1, %s9
      %p121 = scmp.lt.s32.totalorder %s9, 3
      %p122 = pnand %p120, %p121
      %p123 = pneg %p122
      // Predicated region
      $region25: #{light_spatial_attention.1} parent=5 // pred_check
        _
      $region26: #{light_spatial_attention.1} parent=5 // pred_check_branch
        %125 = sbr.rel (%p122) target = $region28
      $region27: #{light_spatial_attention.1} parent=5 // pred_region
        %s126 = ssub.s32 %s9, 1
        // Predicated region
        $region29: #{light_spatial_attention.1} parent=27 // pred_check
          %p127 = pneg %p30
        $region30: #{light_spatial_attention.1} parent=27 // pred_check_branch
          %129 = sbr.rel (%p127) target = $region32
        $region31: #{light_spatial_attention.1} parent=27 // pred_region
          %130 = dma.done [#allocation7], 128
        $region32: #{light_spatial_attention.1} parent=27 // pred_fallthru
          _
        %131 = sfence
        %p132 = pneg %p30
        %p133 = pneg %p27
        %p134 = scmp.lt.s32.totalorder %s14, 1
        %s135 = scalar_select %p134, %s14, 1
        %s136 = smul.addr %s135, 2
        %s137 = smul.addr %s136, 4
        %s138 = scalar_lea.vmem %s1, %s137
        %p139 = pneg %p56
        %p140 = pneg %p53
        %p141 = pneg %p82
        %p142 = pneg %p79
        %p143 = scmp.lt.s32.totalorder %s14, 1
        %s144 = scalar_select %p143, %s14, 1
        %s145 = smul.addr %s144, 2
        %s146 = smul.addr %s145, 4
        %s147 = scalar_lea.vmem %s2, %s146
        %p148 = scmp.lt.s32.totalorder %s14, 1
        %s149 = scalar_select %p148, %s14, 1
        %s150 = smul.addr %s149, 2
        %s151 = smul.addr %s150, 4
        %s152 = scalar_lea.vmem %s1, %s151
        %p153 = scmp.lt.s32.totalorder %s14, 1
        %s154 = scalar_select %p153, %s14, 1
        %s155 = smul.addr %s154, 2
        %s156 = smul.addr %s155, 4
        %s157 = scalar_lea.vmem %s2, %s156
        %s158 = sld [smem:[#allocation6]]
        %s159 = sld [smem:[#allocation6 + $0x1]]
        %s160 = sld [smem:[#allocation6 + $0x2]]
        %s161 = sld [smem:[#allocation6 + $0x3]]
        %s162 = sld [smem:[#allocation6 + $0x4]]
        %s163 = sld [smem:[#allocation6 + $0x5]]
        %s164 = sld [smem:[#allocation6 + $0x6]]
        %s165 = sld [smem:[#allocation6 + $0x80]]
        %s166 = sld [smem:[#allocation6 + $0x81]]
        %s167 = sld [smem:[#allocation6 + $0x82]]
        %s168 = sld [smem:[#allocation6 + $0x83]]
        %s169 = sld [smem:[#allocation6 + $0x84]]
        %s170 = sld [smem:[#allocation6 + $0x85]]
        %s171 = sld [smem:[#allocation6 + $0x86]]
        %s172 = sld [smem:[#allocation6 + $0x100]]
        %s173 = sld [smem:[#allocation6 + $0x101]]
        %s174 = sld [smem:[#allocation6 + $0x102]]
        %s175 = sld [smem:[#allocation6 + $0x103]]
        %s176 = sld [smem:[#allocation6 + $0x104]]
        %s177 = sld [smem:[#allocation6 + $0x105]]
        %s178 = sld [smem:[#allocation6 + $0x106]]
        %s179 = sld [smem:[#allocation6 + $0x180]]
        %s180 = sld [smem:[#allocation6 + $0x181]]
        %s181 = sld [smem:[#allocation6 + $0x182]]
        %s182 = sld [smem:[#allocation6 + $0x183]]
        %s183 = sld [smem:[#allocation6 + $0x184]]
        %s184 = sld [smem:[#allocation6 + $0x185]]
        %s185 = sld [smem:[#allocation6 + $0x186]]
        %s186 = sld [smem:[#allocation6 + $0x200]]
        %s187 = sld [smem:[#allocation6 + $0x201]]
        %s188 = sld [smem:[#allocation6 + $0x202]]
        %s189 = sld [smem:[#allocation6 + $0x203]]
        %s190 = sld [smem:[#allocation6 + $0x204]]
        %s191 = sld [smem:[#allocation6 + $0x205]]
        %s192 = sld [smem:[#allocation6 + $0x206]]
        %s193 = sld [smem:[#allocation6 + $0x280]]
        %s194 = sld [smem:[#allocation6 + $0x281]]
        %s195 = sld [smem:[#allocation6 + $0x282]]
        %s196 = sld [smem:[#allocation6 + $0x283]]
        %s197 = sld [smem:[#allocation6 + $0x284]]
        %s198 = sld [smem:[#allocation6 + $0x285]]
        %s199 = sld [smem:[#allocation6 + $0x286]]
        %s200 = sld [smem:[#allocation6 + $0x300]]
        %s201 = sld [smem:[#allocation6 + $0x301]]
        %s202 = sld [smem:[#allocation6 + $0x302]]
        %s203 = sld [smem:[#allocation6 + $0x303]]
        %s204 = sld [smem:[#allocation6 + $0x304]]
        %s205 = sld [smem:[#allocation6 + $0x305]]
        %s206 = sld [smem:[#allocation6 + $0x306]]
        %s207 = smul.u32 0, 2
        %s208 = smul.addr %s207, 4
        %s209 = scalar_lea.vmem %s152, %s208
        %v210 = vld [vmem:[%s209] sm:$0xff]
        %v211 = vadd.f32 %v210, 0.0
        %v213 = vcombine.high %v211, %v211
        %vm215 = vcmask 1043456
        %v216 = vsel %vm215, %v211, 0.0
        %v217 = vrot.slane %v216, 4
        %v218 = vadd.f32 %v216, %v217
        %v219 = vrot.slane %v218, 2
        %v220 = vadd.f32 %v218, %v219
        %v221 = vrot.slane %v220, 1
        %v222 = vadd.f32 %v220, %v221
        %v223 = vsel %vm215, %v213, 0.0
        %v224 = vrot.slane %v223, 4
        %v225 = vadd.f32 %v223, %v224
        %v226 = vrot.slane %v225, 2
        %v227 = vadd.f32 %v225, %v226
        %v228 = vrot.slane %v227, 1
        %v229 = vadd.f32 %v227, %v228
        %v230 = vmul.f32 %v222, 0.125
        %v231 = vmul.f32 %v229, 0.125
        %v233 = vcombine.high %v210, %v210
        %v235 = vsel %vm215, %v210, -inf
        %v236 = vrot.slane %v235, 4
        %v237 = vmax.f32 %v235, %v236
        %v238 = vrot.slane %v237, 2
        %v239 = vmax.f32 %v237, %v238
        %v240 = vrot.slane %v239, 1
        %v241 = vmax.f32 %v239, %v240
        %v242 = vsel %vm215, %v233, -inf
        %v243 = vrot.slane %v242, 4
        %v244 = vmax.f32 %v242, %v243
        %v245 = vrot.slane %v244, 2
        %v246 = vmax.f32 %v244, %v245
        %v247 = vrot.slane %v246, 1
        %v248 = vmax.f32 %v246, %v247
        %v249 = vmul.f32 %v241, 0.5
        %v250 = vmul.f32 %v248, 0.5
        %v251 = vadd.f32 %v230, %v249
        %v252 = vadd.f32 %v231, %v250
        %vm253 = vcmask 179200
        %254 = vst.msk [vmem:[#allocation2] sm:$0xff] %vm253, 0.0
        %255 = vst.msk [vmem:[#allocation2 + $0x8] sm:$0xff] %vm253, 0.0
        %vm256 = vcmask 177152
        %257 = vst.msk [vmem:[#allocation2 + $0x10] sm:$0x3f] %vm256, 0.0
        %259 = vrot.lane.b32.xlu0 %v251, 3
        %v260 = vpop.permute.xlu0 %259
        %vm262 = vcmask 147480
        %263 = vst.msk [vmem:[#allocation2 + $0x3] sm:$0x1] %vm262, %v260
        %264 = vrot.lane.b32.xlu0 %v251, 115
        %v265 = vpop.permute.xlu0 %264
        %267 = vst.msk [vmem:[#allocation2 + $0x4] sm:$0x1] %vm262, %v265
        %268 = vrot.lane.b32.xlu0 %v251, 99
        %v269 = vpop.permute.xlu0 %268
        %271 = vst.msk [vmem:[#allocation2 + $0x5] sm:$0x1] %vm262, %v269
        %272 = vrot.lane.b32.xlu0 %v251, 83
        %v273 = vpop.permute.xlu0 %272
        %275 = vst.msk [vmem:[#allocation2 + $0x6] sm:$0x1] %vm262, %v273
        %276 = vrot.lane.b32.xlu0 %v251, 67
        %v277 = vpop.permute.xlu0 %276
        %279 = vst.msk [vmem:[#allocation2 + $0x7] sm:$0x1] %vm262, %v277
        %280 = vrot.lane.b32.xlu0 %v251, 51
        %v281 = vpop.permute.xlu0 %280
        %283 = vst.msk [vmem:[#allocation2 + $0x8] sm:$0x1] %vm262, %v281
        %284 = vrot.lane.b32.xlu0 %v251, 35
        %v285 = vpop.permute.xlu0 %284
        %287 = vst.msk [vmem:[#allocation2 + $0x9] sm:$0x1] %vm262, %v285
        %288 = vrot.lane.b32.xlu0 %v251, 19
        %v289 = vpop.permute.xlu0 %288
        %291 = vst.msk [vmem:[#allocation2 + $0xa] sm:$0x1] %vm262, %v289
        %293 = vrot.lane.b32.xlu0 %v252, 3
        %v294 = vpop.permute.xlu0 %293
        %296 = vst.msk [vmem:[#allocation2 + $0xb] sm:$0x1] %vm262, %v294
        %297 = vrot.lane.b32.xlu0 %v252, 115
        %v298 = vpop.permute.xlu0 %297
        %300 = vst.msk [vmem:[#allocation2 + $0xc] sm:$0x1] %vm262, %v298
        %301 = vrot.lane.b32.xlu0 %v252, 99
        %v302 = vpop.permute.xlu0 %301
        %304 = vst.msk [vmem:[#allocation2 + $0xd] sm:$0x1] %vm262, %v302
        %305 = vrot.lane.b32.xlu0 %v252, 83
        %v306 = vpop.permute.xlu0 %305
        %308 = vst.msk [vmem:[#allocation2 + $0xe] sm:$0x1] %vm262, %v306
        %309 = vrot.lane.b32.xlu0 %v252, 67
        %v310 = vpop.permute.xlu0 %309
        %312 = vst.msk [vmem:[#allocation2 + $0xf] sm:$0x1] %vm262, %v310
        %313 = vrot.lane.b32.xlu0 %v252, 51
        %v314 = vpop.permute.xlu0 %313
        %316 = vst.msk [vmem:[#allocation2 + $0x10] sm:$0x1] %vm262, %v314
        %317 = vrot.lane.b32.xlu0 %v252, 35
        %v318 = vpop.permute.xlu0 %317
        %320 = vst.msk [vmem:[#allocation2 + $0x11] sm:$0x1] %vm262, %v318
        %321 = vrot.lane.b32.xlu0 %v252, 19
        %v322 = vpop.permute.xlu0 %321
        %324 = vst.msk [vmem:[#allocation2 + $0x12] sm:$0x1] %vm262, %v322
        %v325 = vld [vmem:[#allocation2] sm:$0xff]
        %v326 = vld [vmem:[#allocation2 + $0x8] sm:$0xff]
        %v327 = vld [vmem:[#allocation2 + $0x10] sm:$0x3f]
        %vm328 = vcmask 130048
        %329 = vst.msk [vmem:[#allocation3] sm:$0xff] %vm328, %v325
        %330 = vst.msk [vmem:[#allocation3 + $0x8] sm:$0xff] %vm328, %v326
        %vm331 = vcmask 128000
        %332 = vst.msk [vmem:[#allocation3 + $0x10] sm:$0x3f] %vm331, %v327
        %v333 = vld [vmem:[#allocation2] sm:$0xff]
        %v334 = vld [vmem:[#allocation2 + $0x8] sm:$0xff]
        %v335 = vld [vmem:[#allocation2 + $0x10] sm:$0x3f]
        %339 = vrot.lane.b32.xlu0 %v333, 127
        %v340 = vpop.permute.xlu0 %339
        %341 = vrot.lane.b32.xlu0 %v334, 127
        %v342 = vpop.permute.xlu0 %341
        %343 = vrot.lane.b32.xlu0 %v335, 127
        %v344 = vpop.permute.xlu0 %343
        %s348 = scalar_lea.vmem [#allocation3], 24
        %349 = vst.msk [vmem:[%s348] sm:$0xff] %vm328, %v340
        %350 = vst.msk [vmem:[%s348 + $0x8] sm:$0xff] %vm328, %v342
        %351 = vst.msk [vmem:[%s348 + $0x10] sm:$0x3f] %vm331, %v344
        %v352 = vld [vmem:[#allocation2] sm:$0xff]
        %v353 = vld [vmem:[#allocation2 + $0x8] sm:$0xff]
        %v354 = vld [vmem:[#allocation2 + $0x10] sm:$0x3f]
        %358 = vrot.lane.b32.xlu0 %v352, 126
        %v359 = vpop.permute.xlu0 %358
        %360 = vrot.lane.b32.xlu0 %v353, 126
        %v361 = vpop.permute.xlu0 %360
        %362 = vrot.lane.b32.xlu0 %v354, 126
        %v363 = vpop.permute.xlu0 %362
        %s367 = scalar_lea.vmem [#allocation3], 48
        %368 = vst.msk [vmem:[%s367] sm:$0xff] %vm328, %v359
        %369 = vst.msk [vmem:[%s367 + $0x8] sm:$0xff] %vm328, %v361
        %370 = vst.msk [vmem:[%s367 + $0x10] sm:$0x3f] %vm331, %v363
        %v371 = vld [vmem:[#allocation2] sm:$0xff]
        %v372 = vld [vmem:[#allocation2 + $0x8] sm:$0xff]
        %v373 = vld [vmem:[#allocation2 + $0x10] sm:$0x3f]
        %377 = vrot.lane.b32.xlu0 %v371, 125
        %v378 = vpop.permute.xlu0 %377
        %379 = vrot.lane.b32.xlu0 %v372, 125
        %v380 = vpop.permute.xlu0 %379
        %381 = vrot.lane.b32.xlu0 %v373, 125
        %v382 = vpop.permute.xlu0 %381
        %s386 = scalar_lea.vmem [#allocation3], 72
        %387 = vst.msk [vmem:[%s386] sm:$0xff] %vm328, %v378
        %388 = vst.msk [vmem:[%s386 + $0x8] sm:$0xff] %vm328, %v380
        %389 = vst.msk [vmem:[%s386 + $0x10] sm:$0x3f] %vm331, %v382
        %v390 = vld [vmem:[#allocation2] sm:$0xff]
        %v391 = vld [vmem:[#allocation2 + $0x8] sm:$0xff]
        %v392 = vld [vmem:[#allocation2 + $0x10] sm:$0x3f]
        %396 = vrot.lane.b32.xlu0 %v390, 124
        %v397 = vpop.permute.xlu0 %396
        %398 = vrot.lane.b32.xlu0 %v391, 124
        %v399 = vpop.permute.xlu0 %398
        %400 = vrot.lane.b32.xlu0 %v392, 124
        %v401 = vpop.permute.xlu0 %400
        %s405 = scalar_lea.vmem [#allocation3], 96
        %406 = vst.msk [vmem:[%s405] sm:$0xff] %vm328, %v397
        %407 = vst.msk [vmem:[%s405 + $0x8] sm:$0xff] %vm328, %v399
        %408 = vst.msk [vmem:[%s405 + $0x10] sm:$0x3f] %vm331, %v401
        %v409 = vld [vmem:[#allocation2] sm:$0xff]
        %v410 = vld [vmem:[#allocation2 + $0x8] sm:$0xff]
        %v411 = vld [vmem:[#allocation2 + $0x10] sm:$0x3f]
        %415 = vrot.lane.b32.xlu0 %v409, 123
        %v416 = vpop.permute.xlu0 %415
        %417 = vrot.lane.b32.xlu0 %v410, 123
        %v418 = vpop.permute.xlu0 %417
        %419 = vrot.lane.b32.xlu0 %v411, 123
        %v420 = vpop.permute.xlu0 %419
        %s424 = scalar_lea.vmem [#allocation3], 120
        %425 = vst.msk [vmem:[%s424] sm:$0xff] %vm328, %v416
        %426 = vst.msk [vmem:[%s424 + $0x8] sm:$0xff] %vm328, %v418
        %427 = vst.msk [vmem:[%s424 + $0x10] sm:$0x3f] %vm331, %v420
        %v428 = vld [vmem:[#allocation2] sm:$0xff]
        %v429 = vld [vmem:[#allocation2 + $0x8] sm:$0xff]
        %v430 = vld [vmem:[#allocation2 + $0x10] sm:$0x3f]
        %434 = vrot.lane.b32.xlu0 %v428, 122
        %v435 = vpop.permute.xlu0 %434
        %436 = vrot.lane.b32.xlu0 %v429, 122
        %v437 = vpop.permute.xlu0 %436
        %438 = vrot.lane.b32.xlu0 %v430, 122
        %v439 = vpop.permute.xlu0 %438
        %s443 = scalar_lea.vmem [#allocation3], 144
        %444 = vst.msk [vmem:[%s443] sm:$0xff] %vm328, %v435
        %445 = vst.msk [vmem:[%s443 + $0x8] sm:$0xff] %vm328, %v437
        %446 = vst.msk [vmem:[%s443 + $0x10] sm:$0x3f] %vm331, %v439
        %v447 = vld [vmem:[#allocation3] sm:$0xff]
        %v448 = vld [vmem:[#allocation3 + $0x8] sm:$0xff]
        %v449 = vstv %s158
        %v450 = vmul.f32 %v449, %v447
        %v451 = vmul.f32 %v449, %v448
        %v452 = vld [vmem:[%s348] sm:$0xff]
        %v453 = vld [vmem:[%s348 + $0x8] sm:$0xff]
        %v454 = vstv %s159
        %v455 = vmul.f32 %v454, %v452
        %v456 = vmul.f32 %v454, %v453
        %v457 = vadd.f32 %v450, %v455
        %v458 = vadd.f32 %v451, %v456
        %v459 = vld [vmem:[%s367] sm:$0xff]
        %v460 = vld [vmem:[%s367 + $0x8] sm:$0xff]
        %v461 = vstv %s160
        %v462 = vmul.f32 %v461, %v459
        %v463 = vmul.f32 %v461, %v460
        %v464 = vadd.f32 %v457, %v462
        %v465 = vadd.f32 %v458, %v463
        %v466 = vld [vmem:[%s386] sm:$0xff]
        %v467 = vld [vmem:[%s386 + $0x8] sm:$0xff]
        %v468 = vstv %s161
        %v469 = vmul.f32 %v468, %v466
        %v470 = vmul.f32 %v468, %v467
        %v471 = vadd.f32 %v464, %v469
        %v472 = vadd.f32 %v465, %v470
        %v473 = vld [vmem:[%s405] sm:$0xff]
        %v474 = vld [vmem:[%s405 + $0x8] sm:$0xff]
        %v475 = vstv %s162
        %v476 = vmul.f32 %v475, %v473
        %v477 = vmul.f32 %v475, %v474
        %v478 = vadd.f32 %v471, %v476
        %v479 = vadd.f32 %v472, %v477
        %v480 = vld [vmem:[%s424] sm:$0xff]
        %v481 = vld [vmem:[%s424 + $0x8] sm:$0xff]
        %v482 = vstv %s163
        %v483 = vmul.f32 %v482, %v480
        %v484 = vmul.f32 %v482, %v481
        %v485 = vadd.f32 %v478, %v483
        %v486 = vadd.f32 %v479, %v484
        %v487 = vld [vmem:[%s443] sm:$0xff]
        %v488 = vld [vmem:[%s443 + $0x8] sm:$0xff]
        %v489 = vstv %s164
        %v490 = vmul.f32 %v489, %v487
        %v491 = vmul.f32 %v489, %v488
        %v492 = vadd.f32 %v485, %v490
        %v493 = vadd.f32 %v486, %v491
        %v494 = vld [vmem:[#allocation3 + $0x1] sm:$0xff]
        %v495 = vld [vmem:[#allocation3 + $0x9] sm:$0xff]
        %v496 = vstv %s165
        %v497 = vmul.f32 %v496, %v494
        %v498 = vmul.f32 %v496, %v495
        %v499 = vld [vmem:[%s348 + $0x1] sm:$0xff]
        %v500 = vld [vmem:[%s348 + $0x9] sm:$0xff]
        %v501 = vstv %s166
        %v502 = vmul.f32 %v501, %v499
        %v503 = vmul.f32 %v501, %v500
        %v504 = vadd.f32 %v497, %v502
        %v505 = vadd.f32 %v498, %v503
        %v506 = vld [vmem:[%s367 + $0x1] sm:$0xff]
        %v507 = vld [vmem:[%s367 + $0x9] sm:$0xff]
        %v508 = vstv %s167
        %v509 = vmul.f32 %v508, %v506
        %v510 = vmul.f32 %v508, %v507
        %v511 = vadd.f32 %v504, %v509
        %v512 = vadd.f32 %v505, %v510
        %v513 = vld [vmem:[%s386 + $0x1] sm:$0xff]
        %v514 = vld [vmem:[%s386 + $0x9] sm:$0xff]
        %v515 = vstv %s168
        %v516 = vmul.f32 %v515, %v513
        %v517 = vmul.f32 %v515, %v514
        %v518 = vadd.f32 %v511, %v516
        %v519 = vadd.f32 %v512, %v517
        %v520 = vld [vmem:[%s405 + $0x1] sm:$0xff]
        %v521 = vld [vmem:[%s405 + $0x9] sm:$0xff]
        %v522 = vstv %s169
        %v523 = vmul.f32 %v522, %v520
        %v524 = vmul.f32 %v522, %v521
        %v525 = vadd.f32 %v518, %v523
        %v526 = vadd.f32 %v519, %v524
        %v527 = vld [vmem:[%s424 + $0x1] sm:$0xff]
        %v528 = vld [vmem:[%s424 + $0x9] sm:$0xff]
        %v529 = vstv %s170
        %v530 = vmul.f32 %v529, %v527
        %v531 = vmul.f32 %v529, %v528
        %v532 = vadd.f32 %v525, %v530
        %v533 = vadd.f32 %v526, %v531
        %v534 = vld [vmem:[%s443 + $0x1] sm:$0xff]
        %v535 = vld [vmem:[%s443 + $0x9] sm:$0xff]
        %v536 = vstv %s171
        %v537 = vmul.f32 %v536, %v534
        %v538 = vmul.f32 %v536, %v535
        %v539 = vadd.f32 %v532, %v537
        %v540 = vadd.f32 %v533, %v538
        %v541 = vld [vmem:[#allocation3 + $0x2] sm:$0xff]
        %v542 = vld [vmem:[#allocation3 + $0xa] sm:$0xff]
        %v543 = vstv %s172
        %v544 = vmul.f32 %v543, %v541
        %v545 = vmul.f32 %v543, %v542
        %v546 = vld [vmem:[%s348 + $0x2] sm:$0xff]
        %v547 = vld [vmem:[%s348 + $0xa] sm:$0xff]
        %v548 = vstv %s173
        %v549 = vmul.f32 %v548, %v546
        %v550 = vmul.f32 %v548, %v547
        %v551 = vadd.f32 %v544, %v549
        %v552 = vadd.f32 %v545, %v550
        %v553 = vld [vmem:[%s367 + $0x2] sm:$0xff]
        %v554 = vld [vmem:[%s367 + $0xa] sm:$0xff]
        %v555 = vstv %s174
        %v556 = vmul.f32 %v555, %v553
        %v557 = vmul.f32 %v555, %v554
        %v558 = vadd.f32 %v551, %v556
        %v559 = vadd.f32 %v552, %v557
        %v560 = vld [vmem:[%s386 + $0x2] sm:$0xff]
        %v561 = vld [vmem:[%s386 + $0xa] sm:$0xff]
        %v562 = vstv %s175
        %v563 = vmul.f32 %v562, %v560
        %v564 = vmul.f32 %v562, %v561
        %v565 = vadd.f32 %v558, %v563
        %v566 = vadd.f32 %v559, %v564
        %v567 = vld [vmem:[%s405 + $0x2] sm:$0xff]
        %v568 = vld [vmem:[%s405 + $0xa] sm:$0xff]
        %v569 = vstv %s176
        %v570 = vmul.f32 %v569, %v567
        %v571 = vmul.f32 %v569, %v568
        %v572 = vadd.f32 %v565, %v570
        %v573 = vadd.f32 %v566, %v571
        %v574 = vld [vmem:[%s424 + $0x2] sm:$0xff]
        %v575 = vld [vmem:[%s424 + $0xa] sm:$0xff]
        %v576 = vstv %s177
        %v577 = vmul.f32 %v576, %v574
        %v578 = vmul.f32 %v576, %v575
        %v579 = vadd.f32 %v572, %v577
        %v580 = vadd.f32 %v573, %v578
        %v581 = vld [vmem:[%s443 + $0x2] sm:$0xff]
        %v582 = vld [vmem:[%s443 + $0xa] sm:$0xff]
        %v583 = vstv %s178
        %v584 = vmul.f32 %v583, %v581
        %v585 = vmul.f32 %v583, %v582
        %v586 = vadd.f32 %v579, %v584
        %v587 = vadd.f32 %v580, %v585
        %v588 = vld [vmem:[#allocation3 + $0x3] sm:$0xff]
        %v589 = vld [vmem:[#allocation3 + $0xb] sm:$0xff]
        %v590 = vstv %s179
        %v591 = vmul.f32 %v590, %v588
        %v592 = vmul.f32 %v590, %v589
        %v593 = vld [vmem:[%s348 + $0x3] sm:$0xff]
        %v594 = vld [vmem:[%s348 + $0xb] sm:$0xff]
        %v595 = vstv %s180
        %v596 = vmul.f32 %v595, %v593
        %v597 = vmul.f32 %v595, %v594
        %v598 = vadd.f32 %v591, %v596
        %v599 = vadd.f32 %v592, %v597
        %v600 = vld [vmem:[%s367 + $0x3] sm:$0xff]
        %v601 = vld [vmem:[%s367 + $0xb] sm:$0xff]
        %v602 = vstv %s181
        %v603 = vmul.f32 %v602, %v600
        %v604 = vmul.f32 %v602, %v601
        %v605 = vadd.f32 %v598, %v603
        %v606 = vadd.f32 %v599, %v604
        %v607 = vld [vmem:[%s386 + $0x3] sm:$0xff]
        %v608 = vld [vmem:[%s386 + $0xb] sm:$0xff]
        %v609 = vstv %s182
        %v610 = vmul.f32 %v609, %v607
        %v611 = vmul.f32 %v609, %v608
        %v612 = vadd.f32 %v605, %v610
        %v613 = vadd.f32 %v606, %v611
        %v614 = vld [vmem:[%s405 + $0x3] sm:$0xff]
        %v615 = vld [vmem:[%s405 + $0xb] sm:$0xff]
        %v616 = vstv %s183
        %v617 = vmul.f32 %v616, %v614
        %v618 = vmul.f32 %v616, %v615
        %v619 = vadd.f32 %v612, %v617
        %v620 = vadd.f32 %v613, %v618
        %v621 = vld [vmem:[%s424 + $0x3] sm:$0xff]
        %v622 = vld [vmem:[%s424 + $0xb] sm:$0xff]
        %v623 = vstv %s184
        %v624 = vmul.f32 %v623, %v621
        %v625 = vmul.f32 %v623, %v622
        %v626 = vadd.f32 %v619, %v624
        %v627 = vadd.f32 %v620, %v625
        %v628 = vld [vmem:[%s443 + $0x3] sm:$0xff]
        %v629 = vld [vmem:[%s443 + $0xb] sm:$0xff]
        %v630 = vstv %s185
        %v631 = vmul.f32 %v630, %v628
        %v632 = vmul.f32 %v630, %v629
        %v633 = vadd.f32 %v626, %v631
        %v634 = vadd.f32 %v627, %v632
        %v635 = vld [vmem:[#allocation3 + $0x4] sm:$0xff]
        %v636 = vld [vmem:[#allocation3 + $0xc] sm:$0xff]
        %v637 = vstv %s186
        %v638 = vmul.f32 %v637, %v635
        %v639 = vmul.f32 %v637, %v636
        %v640 = vld [vmem:[%s348 + $0x4] sm:$0xff]
        %v641 = vld [vmem:[%s348 + $0xc] sm:$0xff]
        %v642 = vstv %s187
        %v643 = vmul.f32 %v642, %v640
        %v644 = vmul.f32 %v642, %v641
        %v645 = vadd.f32 %v638, %v643
        %v646 = vadd.f32 %v639, %v644
        %v647 = vld [vmem:[%s367 + $0x4] sm:$0xff]
        %v648 = vld [vmem:[%s367 + $0xc] sm:$0xff]
        %v649 = vstv %s188
        %v650 = vmul.f32 %v649, %v647
        %v651 = vmul.f32 %v649, %v648
        %v652 = vadd.f32 %v645, %v650
        %v653 = vadd.f32 %v646, %v651
        %v654 = vld [vmem:[%s386 + $0x4] sm:$0xff]
        %v655 = vld [vmem:[%s386 + $0xc] sm:$0xff]
        %v656 = vstv %s189
        %v657 = vmul.f32 %v656, %v654
        %v658 = vmul.f32 %v656, %v655
        %v659 = vadd.f32 %v652, %v657
        %v660 = vadd.f32 %v653, %v658
        %v661 = vld [vmem:[%s405 + $0x4] sm:$0xff]
        %v662 = vld [vmem:[%s405 + $0xc] sm:$0xff]
        %v663 = vstv %s190
        %v664 = vmul.f32 %v663, %v661
        %v665 = vmul.f32 %v663, %v662
        %v666 = vadd.f32 %v659, %v664
        %v667 = vadd.f32 %v660, %v665
        %v668 = vld [vmem:[%s424 + $0x4] sm:$0xff]
        %v669 = vld [vmem:[%s424 + $0xc] sm:$0xff]
        %v670 = vstv %s191
        %v671 = vmul.f32 %v670, %v668
        %v672 = vmul.f32 %v670, %v669
        %v673 = vadd.f32 %v666, %v671
        %v674 = vadd.f32 %v667, %v672
        %v675 = vld [vmem:[%s443 + $0x4] sm:$0xff]
        %v676 = vld [vmem:[%s443 + $0xc] sm:$0xff]
        %v677 = vstv %s192
        %v678 = vmul.f32 %v677, %v675
        %v679 = vmul.f32 %v677, %v676
        %v680 = vadd.f32 %v673, %v678
        %v681 = vadd.f32 %v674, %v679
        %v682 = vld [vmem:[#allocation3 + $0x5] sm:$0xff]
        %v683 = vld [vmem:[#allocation3 + $0xd] sm:$0xff]
        %v684 = vstv %s193
        %v685 = vmul.f32 %v684, %v682
        %v686 = vmul.f32 %v684, %v683
        %v687 = vld [vmem:[%s348 + $0x5] sm:$0xff]
        %v688 = vld [vmem:[%s348 + $0xd] sm:$0xff]
        %v689 = vstv %s194
        %v690 = vmul.f32 %v689, %v687
        %v691 = vmul.f32 %v689, %v688
        %v692 = vadd.f32 %v685, %v690
        %v693 = vadd.f32 %v686, %v691
        %v694 = vld [vmem:[%s367 + $0x5] sm:$0xff]
        %v695 = vld [vmem:[%s367 + $0xd] sm:$0xff]
        %v696 = vstv %s195
        %v697 = vmul.f32 %v696, %v694
        %v698 = vmul.f32 %v696, %v695
        %v699 = vadd.f32 %v692, %v697
        %v700 = vadd.f32 %v693, %v698
        %v701 = vld [vmem:[%s386 + $0x5] sm:$0xff]
        %v702 = vld [vmem:[%s386 + $0xd] sm:$0xff]
        %v703 = vstv %s196
        %v704 = vmul.f32 %v703, %v701
        %v705 = vmul.f32 %v703, %v702
        %v706 = vadd.f32 %v699, %v704
        %v707 = vadd.f32 %v700, %v705
        %v708 = vld [vmem:[%s405 + $0x5] sm:$0xff]
        %v709 = vld [vmem:[%s405 + $0xd] sm:$0xff]
        %v710 = vstv %s197
        %v711 = vmul.f32 %v710, %v708
        %v712 = vmul.f32 %v710, %v709
        %v713 = vadd.f32 %v706, %v711
        %v714 = vadd.f32 %v707, %v712
        %v715 = vld [vmem:[%s424 + $0x5] sm:$0xff]
        %v716 = vld [vmem:[%s424 + $0xd] sm:$0xff]
        %v717 = vstv %s198
        %v718 = vmul.f32 %v717, %v715
        %v719 = vmul.f32 %v717, %v716
        %v720 = vadd.f32 %v713, %v718
        %v721 = vadd.f32 %v714, %v719
        %v722 = vld [vmem:[%s443 + $0x5] sm:$0xff]
        %v723 = vld [vmem:[%s443 + $0xd] sm:$0xff]
        %v724 = vstv %s199
        %v725 = vmul.f32 %v724, %v722
        %v726 = vmul.f32 %v724, %v723
        %v727 = vadd.f32 %v720, %v725
        %v728 = vadd.f32 %v721, %v726
        %v729 = vld [vmem:[#allocation3 + $0x6] sm:$0xff]
        %v730 = vld [vmem:[#allocation3 + $0xe] sm:$0xff]
        %v731 = vstv %s200
        %v732 = vmul.f32 %v731, %v729
        %v733 = vmul.f32 %v731, %v730
        %v734 = vld [vmem:[%s348 + $0x6] sm:$0xff]
        %v735 = vld [vmem:[%s348 + $0xe] sm:$0xff]
        %v736 = vstv %s201
        %v737 = vmul.f32 %v736, %v734
        %v738 = vmul.f32 %v736, %v735
        %v739 = vadd.f32 %v732, %v737
        %v740 = vadd.f32 %v733, %v738
        %v741 = vld [vmem:[%s367 + $0x6] sm:$0xff]
        %v742 = vld [vmem:[%s367 + $0xe] sm:$0xff]
        %v743 = vstv %s202
        %v744 = vmul.f32 %v743, %v741
        %v745 = vmul.f32 %v743, %v742
        %v746 = vadd.f32 %v739, %v744
        %v747 = vadd.f32 %v740, %v745
        %v748 = vld [vmem:[%s386 + $0x6] sm:$0xff]
        %v749 = vld [vmem:[%s386 + $0xe] sm:$0xff]
        %v750 = vstv %s203
        %v751 = vmul.f32 %v750, %v748
        %v752 = vmul.f32 %v750, %v749
        %v753 = vadd.f32 %v746, %v751
        %v754 = vadd.f32 %v747, %v752
        %v755 = vld [vmem:[%s405 + $0x6] sm:$0xff]
        %v756 = vld [vmem:[%s405 + $0xe] sm:$0xff]
        %v757 = vstv %s204
        %v758 = vmul.f32 %v757, %v755
        %v759 = vmul.f32 %v757, %v756
        %v760 = vadd.f32 %v753, %v758
        %v761 = vadd.f32 %v754, %v759
        %v762 = vld [vmem:[%s424 + $0x6] sm:$0xff]
        %v763 = vld [vmem:[%s424 + $0xe] sm:$0xff]
        %v764 = vstv %s205
        %v765 = vmul.f32 %v764, %v762
        %v766 = vmul.f32 %v764, %v763
        %v767 = vadd.f32 %v760, %v765
        %v768 = vadd.f32 %v761, %v766
        %v769 = vld [vmem:[%s443 + $0x6] sm:$0xff]
        %v770 = vld [vmem:[%s443 + $0xe] sm:$0xff]
        %v771 = vstv %s206
        %v772 = vmul.f32 %v771, %v769
        %v773 = vmul.f32 %v771, %v770
        %v774 = vadd.f32 %v767, %v772
        %v775 = vadd.f32 %v768, %v773
        %v776 = vadd.f32 %v492, %v539
        %v777 = vadd.f32 %v493, %v540
        %v778 = vadd.f32 %v586, %v633
        %v779 = vadd.f32 %v587, %v634
        %v780 = vadd.f32 %v776, %v778
        %v781 = vadd.f32 %v777, %v779
        %v782 = vadd.f32 %v680, %v727
        %v783 = vadd.f32 %v681, %v728
        %v784 = vadd.f32 %v782, %v774
        %v785 = vadd.f32 %v783, %v775
        %v786 = vadd.f32 %v780, %v784
        %v787 = vadd.f32 %v781, %v785
        %v788 = vxor.u32 %v786, 2147483648
        %v789 = vxor.u32 %v787, 2147483648
        %v790 = vmul.f32 %v788, 1.442695
        %v791 = vpow.pop %v790
        %v792 = vmul.f32 %v789, 1.442695
        %v793 = vpow.pop %v792
        %v794 = vadd.f32 %v791, 1.0
        %v795 = vadd.f32 %v793, 1.0
        %v796 = vrcp.pop %v794
        %v797 = vmul.f32 1.0, %v796
        %v798 = vrcp.pop %v795
        %v799 = vmul.f32 1.0, %v798
        %800 = vst.msk [vmem:[#allocation4] sm:$0xff] %vm328, %v797
        %801 = vst.msk [vmem:[#allocation4 + $0x8] sm:$0xff] %vm328, %v799
        %v802 = vld [vmem:[#allocation4] sm:$0x1]
        %v803 = vlaneseq
        %vm804 = vcmp.ge.s32.totalorder %v803, 0
        %vm805 = vcmp.lt.s32.totalorder %v803, 16
        %vm806 = vmand %vm804, %vm805
        %807 = vst.msk [vmem:[#allocation5] sm:$0x1] %vm806, %v802
        %v808 = vld [vmem:[#allocation4 + $0x1] sm:$0x1]
        %v811 = vunpack.c.l.s4 1966171168
        %v812 = vunpack.c.0.s8 %v811
        %v813 = vlaneseq
        %v814 = vshrl.u32 %v813, 7
        %v815 = vsub.s32 %v812, %v814
        %v816 = vrot.slane %v808, %v815
        %v818 = vunpack.c.l.s4 1966171168
        %v819 = vunpack.c.0.s8 %v818
        %v820 = vlaneseq
        %v821 = vshrl.u32 %v820, 7
        %v822 = vsub.s32 %v819, %v821
        %v823 = vrot.slane %v816, %v822
        %824 = vrot.lane.b32.xlu0 %v823, 16
        %v825 = vpop.permute.xlu0 %824
        %vm827 = vcmp.ge.s32.totalorder %v803, 16
        %vm828 = vcmp.lt.s32.totalorder %v803, 32
        %vm829 = vmand %vm827, %vm828
        %830 = vst.msk [vmem:[#allocation5] sm:$0x1] %vm829, %v825
        %v831 = vld [vmem:[#allocation4 + $0x2] sm:$0x1]
        %v834 = vunpack.c.l.s4 1966171168
        %v835 = vunpack.c.0.s8 %v834
        %v836 = vlaneseq
        %v837 = vshrl.u32 %v836, 7
        %v838 = vsub.s32 %v835, %v837
        %v839 = vrot.slane %v831, %v838
        %v841 = vunpack.c.l.s4 1966171168
        %v842 = vunpack.c.0.s8 %v841
        %v843 = vlaneseq
        %v844 = vshrl.u32 %v843, 7
        %v845 = vsub.s32 %v842, %v844
        %v846 = vrot.slane %v839, %v845
        %847 = vrot.lane.b32.xlu0 %v846, 32
        %v848 = vpop.permute.xlu0 %847
        %vm850 = vcmp.ge.s32.totalorder %v803, 32
        %vm851 = vcmp.lt.s32.totalorder %v803, 48
        %vm852 = vmand %vm850, %vm851
        %853 = vst.msk [vmem:[#allocation5] sm:$0x1] %vm852, %v848
        %v854 = vld [vmem:[#allocation4 + $0x3] sm:$0x1]
        %v857 = vunpack.c.l.s4 1966171168
        %v858 = vunpack.c.0.s8 %v857
        %v859 = vlaneseq
        %v860 = vshrl.u32 %v859, 7
        %v861 = vsub.s32 %v858, %v860
        %v862 = vrot.slane %v854, %v861
        %v864 = vunpack.c.l.s4 1966171168
        %v865 = vunpack.c.0.s8 %v864
        %v866 = vlaneseq
        %v867 = vshrl.u32 %v866, 7
        %v868 = vsub.s32 %v865, %v867
        %v869 = vrot.slane %v862, %v868
        %870 = vrot.lane.b32.xlu0 %v869, 48
        %v871 = vpop.permute.xlu0 %870
        %vm873 = vcmp.ge.s32.totalorder %v803, 48
        %vm874 = vcmp.lt.s32.totalorder %v803, 64
        %vm875 = vmand %vm873, %vm874
        %876 = vst.msk [vmem:[#allocation5] sm:$0x1] %vm875, %v871
        %v877 = vld [vmem:[#allocation4 + $0x4] sm:$0x1]
        %v880 = vunpack.c.l.s4 1966171168
        %v881 = vunpack.c.0.s8 %v880
        %v882 = vlaneseq
        %v883 = vshrl.u32 %v882, 7
        %v884 = vsub.s32 %v881, %v883
        %v885 = vrot.slane %v877, %v884
        %v887 = vunpack.c.l.s4 1966171168
        %v888 = vunpack.c.0.s8 %v887
        %v889 = vlaneseq
        %v890 = vshrl.u32 %v889, 7
        %v891 = vsub.s32 %v888, %v890
        %v892 = vrot.slane %v885, %v891
        %893 = vrot.lane.b32.xlu0 %v892, 64
        %v894 = vpop.permute.xlu0 %893
        %vm896 = vcmp.ge.s32.totalorder %v803, 64
        %vm897 = vcmp.lt.s32.totalorder %v803, 80
        %vm898 = vmand %vm896, %vm897
        %899 = vst.msk [vmem:[#allocation5] sm:$0x1] %vm898, %v894
        %v900 = vld [vmem:[#allocation4 + $0x5] sm:$0x1]
        %v903 = vunpack.c.l.s4 1966171168
        %v904 = vunpack.c.0.s8 %v903
        %v905 = vlaneseq
        %v906 = vshrl.u32 %v905, 7
        %v907 = vsub.s32 %v904, %v906
        %v908 = vrot.slane %v900, %v907
        %v910 = vunpack.c.l.s4 1966171168
        %v911 = vunpack.c.0.s8 %v910
        %v912 = vlaneseq
        %v913 = vshrl.u32 %v912, 7
        %v914 = vsub.s32 %v911, %v913
        %v915 = vrot.slane %v908, %v914
        %916 = vrot.lane.b32.xlu0 %v915, 80
        %v917 = vpop.permute.xlu0 %916
        %vm919 = vcmp.ge.s32.totalorder %v803, 80
        %vm920 = vcmp.lt.s32.totalorder %v803, 96
        %vm921 = vmand %vm919, %vm920
        %922 = vst.msk [vmem:[#allocation5] sm:$0x1] %vm921, %v917
        %v923 = vld [vmem:[#allocation4 + $0x6] sm:$0x1]
        %v926 = vunpack.c.l.s4 1966171168
        %v927 = vunpack.c.0.s8 %v926
        %v928 = vlaneseq
        %v929 = vshrl.u32 %v928, 7
        %v930 = vsub.s32 %v927, %v929
        %v931 = vrot.slane %v923, %v930
        %v933 = vunpack.c.l.s4 1966171168
        %v934 = vunpack.c.0.s8 %v933
        %v935 = vlaneseq
        %v936 = vshrl.u32 %v935, 7
        %v937 = vsub.s32 %v934, %v936
        %v938 = vrot.slane %v931, %v937
        %939 = vrot.lane.b32.xlu0 %v938, 96
        %v940 = vpop.permute.xlu0 %939
        %vm942 = vcmp.ge.s32.totalorder %v803, 96
        %vm943 = vcmp.lt.s32.totalorder %v803, 112
        %vm944 = vmand %vm942, %vm943
        %945 = vst.msk [vmem:[#allocation5] sm:$0x1] %vm944, %v940
        %v946 = vld [vmem:[#allocation4 + $0x7] sm:$0x1]
        %v949 = vunpack.c.l.s4 1966171168
        %v950 = vunpack.c.0.s8 %v949
        %v951 = vlaneseq
        %v952 = vshrl.u32 %v951, 7
        %v953 = vsub.s32 %v950, %v952
        %v954 = vrot.slane %v946, %v953
        %v956 = vunpack.c.l.s4 1966171168
        %v957 = vunpack.c.0.s8 %v956
        %v958 = vlaneseq
        %v959 = vshrl.u32 %v958, 7
        %v960 = vsub.s32 %v957, %v959
        %v961 = vrot.slane %v954, %v960
        %962 = vrot.lane.b32.xlu0 %v961, 112
        %v963 = vpop.permute.xlu0 %962
        %vm965 = vcmp.ge.s32.totalorder %v803, 112
        %vm966 = vcmp.lt.s32.totalorder %v803, 128
        %vm967 = vmand %vm965, %vm966
        %968 = vst.msk [vmem:[#allocation5] sm:$0x1] %vm967, %v963
        %v969 = vld [vmem:[#allocation4 + $0x8] sm:$0x1]
        %970 = vst.msk [vmem:[#allocation5 + $0x1] sm:$0x1] %vm806, %v969
        %v971 = vld [vmem:[#allocation4 + $0x9] sm:$0x1]
        %v974 = vunpack.c.l.s4 1966171168
        %v975 = vunpack.c.0.s8 %v974
        %v976 = vlaneseq
        %v977 = vshrl.u32 %v976, 7
        %v978 = vsub.s32 %v975, %v977
        %v979 = vrot.slane %v971, %v978
        %v981 = vunpack.c.l.s4 1966171168
        %v982 = vunpack.c.0.s8 %v981
        %v983 = vlaneseq
        %v984 = vshrl.u32 %v983, 7
        %v985 = vsub.s32 %v982, %v984
        %v986 = vrot.slane %v979, %v985
        %987 = vrot.lane.b32.xlu0 %v986, 16
        %v988 = vpop.permute.xlu0 %987
        %990 = vst.msk [vmem:[#allocation5 + $0x1] sm:$0x1] %vm829, %v988
        %v991 = vld [vmem:[#allocation4 + $0xa] sm:$0x1]
        %v994 = vunpack.c.l.s4 1966171168
        %v995 = vunpack.c.0.s8 %v994
        %v996 = vlaneseq
        %v997 = vshrl.u32 %v996, 7
        %v998 = vsub.s32 %v995, %v997
        %v999 = vrot.slane %v991, %v998
        %v1001 = vunpack.c.l.s4 1966171168
        %v1002 = vunpack.c.0.s8 %v1001
        %v1003 = vlaneseq
        %v1004 = vshrl.u32 %v1003, 7
        %v1005 = vsub.s32 %v1002, %v1004
        %v1006 = vrot.slane %v999, %v1005
        %1007 = vrot.lane.b32.xlu0 %v1006, 32
        %v1008 = vpop.permute.xlu0 %1007
        %1010 = vst.msk [vmem:[#allocation5 + $0x1] sm:$0x1] %vm852, %v1008
        %v1011 = vld [vmem:[#allocation4 + $0xb] sm:$0x1]
        %v1014 = vunpack.c.l.s4 1966171168
        %v1015 = vunpack.c.0.s8 %v1014
        %v1016 = vlaneseq
        %v1017 = vshrl.u32 %v1016, 7
        %v1018 = vsub.s32 %v1015, %v1017
        %v1019 = vrot.slane %v1011, %v1018
        %v1021 = vunpack.c.l.s4 1966171168
        %v1022 = vunpack.c.0.s8 %v1021
        %v1023 = vlaneseq
        %v1024 = vshrl.u32 %v1023, 7
        %v1025 = vsub.s32 %v1022, %v1024
        %v1026 = vrot.slane %v1019, %v1025
        %1027 = vrot.lane.b32.xlu0 %v1026, 48
        %v1028 = vpop.permute.xlu0 %1027
        %1030 = vst.msk [vmem:[#allocation5 + $0x1] sm:$0x1] %vm875, %v1028
        %v1031 = vld [vmem:[#allocation4 + $0xc] sm:$0x1]
        %v1034 = vunpack.c.l.s4 1966171168
        %v1035 = vunpack.c.0.s8 %v1034
        %v1036 = vlaneseq
        %v1037 = vshrl.u32 %v1036, 7
        %v1038 = vsub.s32 %v1035, %v1037
        %v1039 = vrot.slane %v1031, %v1038
        %v1041 = vunpack.c.l.s4 1966171168
        %v1042 = vunpack.c.0.s8 %v1041
        %v1043 = vlaneseq
        %v1044 = vshrl.u32 %v1043, 7
        %v1045 = vsub.s32 %v1042, %v1044
        %v1046 = vrot.slane %v1039, %v1045
        %1047 = vrot.lane.b32.xlu0 %v1046, 64
        %v1048 = vpop.permute.xlu0 %1047
        %1050 = vst.msk [vmem:[#allocation5 + $0x1] sm:$0x1] %vm898, %v1048
        %v1051 = vld [vmem:[#allocation4 + $0xd] sm:$0x1]
        %v1054 = vunpack.c.l.s4 1966171168
        %v1055 = vunpack.c.0.s8 %v1054
        %v1056 = vlaneseq
        %v1057 = vshrl.u32 %v1056, 7
        %v1058 = vsub.s32 %v1055, %v1057
        %v1059 = vrot.slane %v1051, %v1058
        %v1061 = vunpack.c.l.s4 1966171168
        %v1062 = vunpack.c.0.s8 %v1061
        %v1063 = vlaneseq
        %v1064 = vshrl.u32 %v1063, 7
        %v1065 = vsub.s32 %v1062, %v1064
        %v1066 = vrot.slane %v1059, %v1065
        %1067 = vrot.lane.b32.xlu0 %v1066, 80
        %v1068 = vpop.permute.xlu0 %1067
        %1070 = vst.msk [vmem:[#allocation5 + $0x1] sm:$0x1] %vm921, %v1068
        %v1071 = vld [vmem:[#allocation4 + $0xe] sm:$0x1]
        %v1074 = vunpack.c.l.s4 1966171168
        %v1075 = vunpack.c.0.s8 %v1074
        %v1076 = vlaneseq
        %v1077 = vshrl.u32 %v1076, 7
        %v1078 = vsub.s32 %v1075, %v1077
        %v1079 = vrot.slane %v1071, %v1078
        %v1081 = vunpack.c.l.s4 1966171168
        %v1082 = vunpack.c.0.s8 %v1081
        %v1083 = vlaneseq
        %v1084 = vshrl.u32 %v1083, 7
        %v1085 = vsub.s32 %v1082, %v1084
        %v1086 = vrot.slane %v1079, %v1085
        %1087 = vrot.lane.b32.xlu0 %v1086, 96
        %v1088 = vpop.permute.xlu0 %1087
        %1090 = vst.msk [vmem:[#allocation5 + $0x1] sm:$0x1] %vm944, %v1088
        %v1091 = vld [vmem:[#allocation4 + $0xf] sm:$0x1]
        %v1094 = vunpack.c.l.s4 1966171168
        %v1095 = vunpack.c.0.s8 %v1094
        %v1096 = vlaneseq
        %v1097 = vshrl.u32 %v1096, 7
        %v1098 = vsub.s32 %v1095, %v1097
        %v1099 = vrot.slane %v1091, %v1098
        %v1101 = vunpack.c.l.s4 1966171168
        %v1102 = vunpack.c.0.s8 %v1101
        %v1103 = vlaneseq
        %v1104 = vshrl.u32 %v1103, 7
        %v1105 = vsub.s32 %v1102, %v1104
        %v1106 = vrot.slane %v1099, %v1105
        %1107 = vrot.lane.b32.xlu0 %v1106, 112
        %v1108 = vpop.permute.xlu0 %1107
        %1110 = vst.msk [vmem:[#allocation5 + $0x1] sm:$0x1] %vm967, %v1108
        %v1111 = vld [vmem:[#allocation5] sm:$0x3]
        %v1113 = vlaneseq
        %v1114 = vshrl.u32 %v1113, 7
        %v1115 = vsub.s32 0, %v1114
        %v1116 = vrot.slane %v1111, %v1115
        %v1117 = vlaneseq
        %v1118 = vshrl.u32 %v1117, 7
        %v1119 = vsub.s32 1, %v1118
        %v1120 = vrot.slane %v1111, %v1119
        %v1121 = vld [vmem:[%s209] sm:$0xff]
        %v1122 = vcombine.low %v1116, %v1120
        %v1124 = vmul.f32 %v1121, %v1122
        %s1125 = smul.addr %s207, 4
        %s1126 = scalar_lea.vmem %s157, %s1125
        %1127 = vst [vmem:[%s1126] sm:$0xff] %v1124
        %p1128 = scmp.lt.s32.totalorder %s14, 1
        %s1129 = scalar_select %p1128, %s14, 1
        %s1130 = smul.addr %s1129, 2
        %s1131 = smul.addr %s1130, 4
        %s1132 = scalar_lea.vmem %s2, %s1131
        // Predicated region
        $region33: #{light_spatial_attention.1} parent=27 // pred_check
          %p1133 = pneg %p79
        $region34: #{light_spatial_attention.1} parent=27 // pred_check_branch
          %1135 = sbr.rel (%p1133) target = $region36
        $region35: #{light_spatial_attention.1} parent=27 // pred_region
          _
        $region36: #{light_spatial_attention.1} parent=27 // pred_fallthru
          _
      $region28: #{light_spatial_attention.1} parent=5 // pred_fallthru
        _
      %p1136 = scmp.le.s32.totalorder 2, %s9
      // Predicated region
      $region37: #{light_spatial_attention.1} parent=5 // pred_check
        %p1137 = pneg %p1136
      $region38: #{light_spatial_attention.1} parent=5 // pred_check_branch
        %1139 = sbr.rel (%p1137) target = $region40
      $region39: #{light_spatial_attention.1} parent=5 // pred_region
        %s1140 = ssub.s32 %s9, 2
        // Predicated region
        $region41: #{light_spatial_attention.1} parent=39 // pred_check
          %p1141 = pneg %p85
        $region42: #{light_spatial_attention.1} parent=39 // pred_check_branch
          %1143 = sbr.rel (%p1141) target = $region44
        $region43: #{light_spatial_attention.1} parent=39 // pred_region
          %p1144 = scmp.lt.s32.totalorder %s15, 1
          %s1145 = scalar_select %p1144, %s15, 1
          %s1146 = smul.addr %s1145, 2
          %s1147 = smul.addr %s1146, 4
          %s1148 = scalar_lea.vmem %s2, %s1147
        $region44: #{light_spatial_attention.1} parent=39 // pred_fallthru
          _
      $region40: #{light_spatial_attention.1} parent=5 // pred_fallthru
        _
    $region6: #{light_spatial_attention.1} parent=1 // loop_footer
      %s13 = sadd.s32 1, %s9
    $region7: #{light_spatial_attention.1} parent=1 // loop_footer_branch
      %8 = sbr.rel target = $region3
    $region8: #{light_spatial_attention.1} parent=1 // loop_exit
      _
    %1149 = vsyncpa [#allocation7], 1
    %s1150 = scalar_lea.sflag [#allocation7], 1
    %1151 = vsyncpa %s1150, 1

</llo_original>
